<compile_context>
chip_gen: v6e
topology: v6e:2x2x1
jax: 0.10.0
libtpu: 0.0.40
codegen_flags: <defaults>
</compile_context>

<pallas_src>
import functools

import jax
import jax.numpy as jnp
from jax.experimental import pallas as pl
from jax.experimental.pallas import tpu as pltpu


def _nonlocal_kernel(x_ref, wqkv_ref, bqkv_ref, ww_ref, bw_ref, z_ref, *,
                     inter_channels, seq_len, batch_blk):
    """One grid step: a (C, batch_blk*seq_len) channels-first slab."""
    ci = inter_channels
    t = seq_len
    x = x_ref[...]                                               # (C, BT) f32
    cdt = wqkv_ref.dtype                                         # compute dtype
    xc = x.astype(cdt)

    # Fused theta/phi/g 1x1 convs: one (3Ci, C) @ (C, BT) MXU matmul, BT >= 128
    # lanes (lane-dense N dim).  f32 accumulation.
    proj = jax.lax.dot_general(
        wqkv_ref[...], xc, (((1,), (0,)), ((), ())),
        preferred_element_type=jnp.float32) + bqkv_ref[...]      # (3Ci, BT) f32

    # Sublane-aligned static slices (Ci asserted to be a multiple of 8 in the
    # wrapper, so these do not cross (8,128) tile boundaries).
    theta = proj[0:ci, :].astype(cdt)        # (Ci, BT) — pre-scaled by 1/N
    phi = proj[ci:2 * ci, :].astype(cdt)     # (Ci, BT)
    g = proj[2 * ci:3 * ci, :].astype(cdt)   # (Ci, BT)

    # Per-batch reassociated attention (exact because there is no softmax):
    #   gp[j, c] = sum_k g[j, k] * phi[c, k]          (Ci, Ci)
    #   y[j, q]  = sum_c gp[j, c] * theta[c, q]       (Ci, T)
    # No (T, T) intermediate; contraction depth is T on the first matmul.
    y_parts = []
    for b in range(batch_blk):               # static, small python loop
        s = b * t
        g_b = g[:, s:s + t]
        phi_b = phi[:, s:s + t]
        theta_b = theta[:, s:s + t]
        gp = jax.lax.dot_general(
            g_b, phi_b, (((1,), (1,)), ((), ())),
            preferred_element_type=jnp.float32)                  # (Ci, Ci) f32
        y_b = jax.lax.dot_general(
            gp.astype(cdt), theta_b, (((1,), (0,)), ((), ())),
            preferred_element_type=jnp.float32)                  # (Ci, T) f32
        y_parts.append(y_b)
    y = y_parts[0] if batch_blk == 1 else jnp.concatenate(y_parts, axis=1)

    # W conv (eval-mode BN folded in) + residual; lane-dense store.
    w_y = jax.lax.dot_general(
        ww_ref[...], y.astype(cdt), (((1,), (0,)), ((), ())),
        preferred_element_type=jnp.float32) + bw_ref[...]        # (C, BT) f32
    z_ref[...] = (w_y + x).astype(z_ref.dtype)


def _choose_batch_block(batch, t):
    """Smallest batch block whose column count (B_blk*T) is a multiple of 128.

    Lane-dense blocks give unmasked vector stores and a wide MXU N dim while
    keeping as many grid steps as possible (multi-TensorCore sharding).  If no
    divisor works, fall back to one full-batch block (block == array dims is
    always a legal BlockSpec).
    """
    for bb in range(1, batch + 1):
        if batch % bb == 0 and (bb * t) % 128 == 0:
            return bb
    return batch


def _vmem_limit_bytes(c, ci, bt_cols, compute_dtype):
    """Scoped-VMEM limit derived from block sizes (with generous headroom)."""
    cw = jnp.dtype(compute_dtype).itemsize
    f32 = 4
    x_block = c * bt_cols * f32
    z_block = c * bt_cols * f32
    weights = (3 * ci * c + c * ci) * cw + (3 * ci + c) * f32
    interm = (3 * ci * bt_cols) * (f32 + cw)       # proj (f32) + casts
    interm += ci * bt_cols * (f32 + cw)            # y (+ cast)
    interm += c * bt_cols * (f32 + cw)             # w_y + x cast
    need = 2 * (x_block + z_block) + 2 * weights + interm
    # Floor for comfort, cap below v7x's 64 MiB physical VMEM.
    return int(min(max(2 * need, 8 * 1024 * 1024), 56 * 1024 * 1024))


def _pallas_nonlocal(x_slab, wqkv, bqkv, ww, bw, *, inter_channels, seq_len,
                     batch_blk, vmem_limit, cost, weight_pipeline_mode):
    c, bt_total = x_slab.shape
    ci = inter_channels
    bt = batch_blk * seq_len
    n_steps = bt_total // bt

    wspec_kwargs = ({} if weight_pipeline_mode is None
                    else {"pipeline_mode": weight_pipeline_mode})
    kernel = functools.partial(_nonlocal_kernel, inter_channels=ci,
                               seq_len=seq_len, batch_blk=batch_blk)

    return pl.pallas_call(
        kernel,
        out_shape=jax.ShapeDtypeStruct((c, bt_total), x_slab.dtype),
        grid_spec=pltpu.PrefetchScalarGridSpec(
            num_scalar_prefetch=0,
            grid=(n_steps,),
            in_specs=[
                pl.BlockSpec((c, bt), lambda i: (0, i)),                 # x slab
                pl.BlockSpec((3 * ci, c), lambda i: (0, 0), **wspec_kwargs),
                pl.BlockSpec((3 * ci, 1), lambda i: (0, 0), **wspec_kwargs),
                pl.BlockSpec((c, ci), lambda i: (0, 0), **wspec_kwargs),
                pl.BlockSpec((c, 1), lambda i: (0, 0), **wspec_kwargs),
            ],
            out_specs=pl.BlockSpec((c, bt), lambda i: (0, i)),
        ),
        compiler_params=pltpu.CompilerParams(
            dimension_semantics=("parallel",),
            vmem_limit_bytes=vmem_limit),
        cost_estimate=cost,
    )(x_slab, wqkv, bqkv, ww, bw)


def nonlocal_block_1d(x_nct, params, compute_dtype=jnp.float32):
    """x_nct: (B, C, T) float32, PyTorch NCT layout. Returns (B, C, T)."""
    B, C, T = x_nct.shape
    wt, bt_, wp, bp, wg, bg, ww, bw = params
    Ci = wt.shape[0]
    # Sublane-aligned theta/phi/g split of the fused projection requires this.
    assert Ci % 8 == 0, "inter_channels must be a multiple of 8"
    # TODO(synk): for Ci % 8 != 0, fall back to three separate projections.

    # Fold 1/N (N = T, sub_sample=False) into theta's weight/bias.  (For very
    # large T with tiny weights this moves values toward bf16 subnormal range;
    # negligible at realistic scales.)
    inv_n = 1.0 / float(T)
    wqkv = jnp.concatenate([wt * inv_n, wp, wg], axis=0).astype(compute_dtype)
    bqkv = jnp.concatenate([bt_ * inv_n, bp, bg], axis=0).reshape(3 * Ci, 1)
    ww_c = ww.astype(compute_dtype)       # eval-mode BN already folded in
    bw2 = bw.reshape(C, 1)

    # Batch-blocked, lane-dense slab layout (pure layout plumbing in XLA).
    B_blk = _choose_batch_block(B, T)
    x_slab = jnp.transpose(x_nct, (1, 0, 2)).reshape(C, B * T)   # (C, B*T)

    # Advisory cost estimate (reassociated form: no T^2 term).
    flops = 2 * B * T * (3 * Ci * C + 2 * Ci * Ci + Ci * C)
    bytes_accessed = int(
        2 * x_nct.size * 4
        + wqkv.size * wqkv.dtype.itemsize + bqkv.size * 4
        + ww_c.size * ww_c.dtype.itemsize + bw2.size * 4)
    cost = pl.CostEstimate(flops=flops, transcendentals=0,
                           bytes_accessed=bytes_accessed)

    vmem_limit = _vmem_limit_bytes(C, Ci, B_blk * T, compute_dtype)

    common = dict(inter_channels=Ci, seq_len=T, batch_blk=B_blk,
                  vmem_limit=vmem_limit, cost=cost)
    try:
        # Grid-invariant weights: request single buffering (reclaims VMEM at
        # production sizes; the default is a wasteful double buffer).
        z_slab = _pallas_nonlocal(x_slab, wqkv, bqkv, ww_c, bw2,
                                  weight_pipeline_mode=pl.Buffered(1), **common)
    except Exception:
        # pipeline_mode not supported by this JAX/Mosaic build -> default
        # double buffering (correctness unaffected).
        z_slab = _pallas_nonlocal(x_slab, wqkv, bqkv, ww_c, bw2,
                                  weight_pipeline_mode=None, **common)

    return jnp.transpose(z_slab.reshape(C, B, T), (1, 0, 2))     # back to NCT


def reference_nonlocal(x_nct, params):
    """Plain-JAX re-statement of the PyTorch forward (NCT layout)."""
    wt, bt_, wp, bp, wg, bg, ww, bw = params
    g_x = jnp.einsum('oc,bct->bot', wg, x_nct) + bg[None, :, None]
    g_x = jnp.transpose(g_x, (0, 2, 1))                           # (B, T, Ci)
    theta_x = jnp.einsum('oc,bct->bot', wt, x_nct) + bt_[None, :, None]
    theta_x = jnp.transpose(theta_x, (0, 2, 1))                   # (B, T, Ci)
    phi_x = jnp.einsum('oc,bct->bot', wp, x_nct) + bp[None, :, None]  # (B, Ci, T)
    f = jnp.matmul(theta_x, phi_x)                                # (B, T, T)
    f_div_c = f / f.shape[-1]
    y = jnp.matmul(f_div_c, g_x)                                  # (B, T, Ci)
    y = jnp.transpose(y, (0, 2, 1))                               # (B, Ci, T)
    w_y = jnp.einsum('oc,bct->bot', ww, y) + bw[None, :, None]    # (B, C, T)
    return w_y + x_nct


def make_params(key, in_channels, inter_channels):
    """Deterministic parameters; BatchNorm1d (eval mode) folded into W conv."""
    ks = jax.random.split(key, 10)
    C, Ci = in_channels, inter_channels
    scale = 0.1
    wt = scale * jax.random.normal(ks[0], (Ci, C), jnp.float32)
    bt = scale * jax.random.normal(ks[1], (Ci,), jnp.float32)
    wp = scale * jax.random.normal(ks[2], (Ci, C), jnp.float32)
    bp = scale * jax.random.normal(ks[3], (Ci,), jnp.float32)
    wg = scale * jax.random.normal(ks[4], (Ci, C), jnp.float32)
    bg = scale * jax.random.normal(ks[5], (Ci,), jnp.float32)
    w_conv = scale * jax.random.normal(ks[6], (C, Ci), jnp.float32)
    b_conv = scale * jax.random.normal(ks[7], (C,), jnp.float32)
    # Eval-mode BatchNorm1d parameters -> fold into the W conv.
    gamma = 1.0 + 0.1 * jax.random.normal(ks[8], (C,), jnp.float32)
    beta = 0.1 * jax.random.normal(ks[9], (C,), jnp.float32)
    running_mean = jnp.zeros((C,), jnp.float32)
    running_var = jnp.ones((C,), jnp.float32)
    eps = 1e-5
    s = gamma / jnp.sqrt(running_var + eps)
    ww = w_conv * s[:, None]
    bw = (b_conv - running_mean) * s + beta
    return (wt, bt, wp, bp, wg, bg, ww, bw)


if __name__ == "__main__":
    B, C, T = 2, 32, 64          # (batch, in_channels, seq) for dimension=1
    Ci = C // 2                  # inter_channels = in_channels // 2

    key = jax.random.PRNGKey(0)
    kx, kp = jax.random.split(key)
    x = jax.random.normal(kx, (B, C, T), jnp.float32)   # PyTorch NCT input
    params = make_params(kp, C, Ci)

    z_ref = reference_nonlocal(x, params)

    # f32 MXU operands (exact-path check; tolerance allows the reassociated
    # summation order).
    z = nonlocal_block_1d(x, params, compute_dtype=jnp.float32)
    z = jax.block_until_ready(z)
    assert z.shape == (B, C, T)
    assert jnp.allclose(z, z_ref, rtol=2e-5, atol=2e-5), "f32 mismatch vs reference"

    # bf16 MXU operands with f32 accumulation (v6e/v7x-friendly path;
    # on v5e benchmark f32 vs bf16 before committing — see review notes).
    z_bf16 = nonlocal_block_1d(x, params, compute_dtype=jnp.bfloat16)
    z_bf16 = jax.block_until_ready(z_bf16)
    assert jnp.allclose(z_bf16, z_ref, rtol=5e-2, atol=5e-2), "bf16 mismatch vs reference"

    print("KERNEL_OK")
</pallas_src>

<mosaic_0001>
module attributes {stable_mosaic.version = 11 : i64} {
  func.func @_nonlocal_kernel(%arg0: i32, %arg1: memref<32x128xf32, #tpu.memory_space<vmem>>, %arg2: memref<48x32xf32, #tpu.memory_space<vmem>>, %arg3: memref<48x1xf32, #tpu.memory_space<vmem>>, %arg4: memref<32x16xf32, #tpu.memory_space<vmem>>, %arg5: memref<32x1xf32, #tpu.memory_space<vmem>>, %arg6: memref<32x128xf32, #tpu.memory_space<vmem>>) attributes {dimension_semantics = [#tpu.dimension_semantics<parallel>], iteration_bounds = array<i64: 1>, scalar_prefetch = 0 : i64, scratch_operands = 0 : i64, tpu.core_type = #tpu.core_type<tc>, window_params = [{transform_indices = @transform_0, window_bounds = array<i64: 32, 128>}, {pipeline_mode = #tpu.pipeline_mode<synchronous>, transform_indices = @transform_1, window_bounds = array<i64: 48, 32>}, {pipeline_mode = #tpu.pipeline_mode<synchronous>, transform_indices = @transform_2, window_bounds = array<i64: 48, 1>}, {pipeline_mode = #tpu.pipeline_mode<synchronous>, transform_indices = @transform_3, window_bounds = array<i64: 32, 16>}, {pipeline_mode = #tpu.pipeline_mode<synchronous>, transform_indices = @transform_4, window_bounds = array<i64: 32, 1>}, {transform_indices = @transform_5, window_bounds = array<i64: 32, 128>}]} {
    %c0 = arith.constant 0 : index
    %c0_0 = arith.constant 0 : index
    %0 = vector.load %arg1[%c0, %c0_0] : memref<32x128xf32, #tpu.memory_space<vmem>>, vector<32x128xf32>
    %c0_1 = arith.constant 0 : index
    %c0_2 = arith.constant 0 : index
    %1 = vector.load %arg2[%c0_1, %c0_2] : memref<48x32xf32, #tpu.memory_space<vmem>>, vector<48x32xf32>
    %cst = arith.constant dense<0.000000e+00> : vector<48x128xf32>
    %2 = tpu.matmul %1, %0, %cst {dimension_numbers = #tpu.dot_dimension_numbers<[1], [0], [0], [1], [0, 0, 1, 1], [], []>} : vector<48x32xf32>, vector<32x128xf32>, vector<48x128xf32> -> vector<48x128xf32>
    %c0_3 = arith.constant 0 : index
    %c0_4 = arith.constant 0 : index
    %3 = vector.load %arg3[%c0_3, %c0_4] : memref<48x1xf32, #tpu.memory_space<vmem>>, vector<48x1xf32>
    %4 = vector.broadcast %3 : vector<48x1xf32> to vector<48x128xf32>
    %5 = arith.addf %2, %4 : vector<48x128xf32>
    %6 = vector.extract_strided_slice %5 {offsets = [0, 0], sizes = [16, 128], strides = [1, 1]} : vector<48x128xf32> to vector<16x128xf32>
    %7 = vector.extract_strided_slice %5 {offsets = [16, 0], sizes = [16, 128], strides = [1, 1]} : vector<48x128xf32> to vector<16x128xf32>
    %8 = vector.extract_strided_slice %5 {offsets = [32, 0], sizes = [16, 128], strides = [1, 1]} : vector<48x128xf32> to vector<16x128xf32>
    %9 = vector.extract_strided_slice %8 {offsets = [0, 0], sizes = [16, 64], strides = [1, 1]} : vector<16x128xf32> to vector<16x64xf32>
    %10 = vector.extract_strided_slice %7 {offsets = [0, 0], sizes = [16, 64], strides = [1, 1]} : vector<16x128xf32> to vector<16x64xf32>
    %11 = vector.extract_strided_slice %6 {offsets = [0, 0], sizes = [16, 64], strides = [1, 1]} : vector<16x128xf32> to vector<16x64xf32>
    %cst_5 = arith.constant dense<0.000000e+00> : vector<16x16xf32>
    %12 = tpu.matmul %9, %10, %cst_5 {dimension_numbers = #tpu.dot_dimension_numbers<[1], [1], [0], [0], [0, 0, 1, 0], [], []>} : vector<16x64xf32>, vector<16x64xf32>, vector<16x16xf32> -> vector<16x16xf32>
    %cst_6 = arith.constant dense<0.000000e+00> : vector<16x64xf32>
    %13 = tpu.matmul %12, %11, %cst_6 {dimension_numbers = #tpu.dot_dimension_numbers<[1], [0], [0], [1], [0, 0, 1, 1], [], []>} : vector<16x16xf32>, vector<16x64xf32>, vector<16x64xf32> -> vector<16x64xf32>
    %14 = vector.extract_strided_slice %8 {offsets = [0, 64], sizes = [16, 64], strides = [1, 1]} : vector<16x128xf32> to vector<16x64xf32>
    %15 = vector.extract_strided_slice %7 {offsets = [0, 64], sizes = [16, 64], strides = [1, 1]} : vector<16x128xf32> to vector<16x64xf32>
    %16 = vector.extract_strided_slice %6 {offsets = [0, 64], sizes = [16, 64], strides = [1, 1]} : vector<16x128xf32> to vector<16x64xf32>
    %cst_7 = arith.constant dense<0.000000e+00> : vector<16x16xf32>
    %17 = tpu.matmul %14, %15, %cst_7 {dimension_numbers = #tpu.dot_dimension_numbers<[1], [1], [0], [0], [0, 0, 1, 0], [], []>} : vector<16x64xf32>, vector<16x64xf32>, vector<16x16xf32> -> vector<16x16xf32>
    %cst_8 = arith.constant dense<0.000000e+00> : vector<16x64xf32>
    %18 = tpu.matmul %17, %16, %cst_8 {dimension_numbers = #tpu.dot_dimension_numbers<[1], [0], [0], [1], [0, 0, 1, 1], [], []>} : vector<16x16xf32>, vector<16x64xf32>, vector<16x64xf32> -> vector<16x64xf32>
    %19 = tpu.concatenate %13, %18 in 1 : vector<16x64xf32>, vector<16x64xf32> -> vector<16x128xf32>
    %c0_9 = arith.constant 0 : index
    %c0_10 = arith.constant 0 : index
    %20 = vector.load %arg4[%c0_9, %c0_10] : memref<32x16xf32, #tpu.memory_space<vmem>>, vector<32x16xf32>
    %cst_11 = arith.constant dense<0.000000e+00> : vector<32x128xf32>
    %21 = tpu.matmul %20, %19, %cst_11 {dimension_numbers = #tpu.dot_dimension_numbers<[1], [0], [0], [1], [0, 0, 1, 1], [], []>} : vector<32x16xf32>, vector<16x128xf32>, vector<32x128xf32> -> vector<32x128xf32>
    %c0_12 = arith.constant 0 : index
    %c0_13 = arith.constant 0 : index
    %22 = vector.load %arg5[%c0_12, %c0_13] : memref<32x1xf32, #tpu.memory_space<vmem>>, vector<32x1xf32>
    %23 = vector.broadcast %22 : vector<32x1xf32> to vector<32x128xf32>
    %24 = arith.addf %21, %23 : vector<32x128xf32>
    %25 = arith.addf %24, %0 : vector<32x128xf32>
    %c0_14 = arith.constant 0 : index
    %c0_15 = arith.constant 0 : index
    %26 = vector.load %arg6[%c0_14, %c0_15] : memref<32x128xf32, #tpu.memory_space<vmem>>, vector<32x128xf32>
    tpu.vector_store %arg6[%c0_14, %c0_15], %25 {strides = array<i32>} : memref<32x128xf32, #tpu.memory_space<vmem>>, vector<32x128xf32>,
    return
  }
  func.func @transform_0(%arg0: i32) -> (i32, i32) {
    %c0_i32 = arith.constant 0 : i32
    %c0_i32_0 = arith.constant 0 : i32
    return %c0_i32, %arg0 : i32, i32
  }
  func.func @transform_1(%arg0: i32) -> (i32, i32) {
    %c0_i32 = arith.constant 0 : i32
    %c0_i32_0 = arith.constant 0 : i32
    %c0_i32_1 = arith.constant 0 : i32
    return %c0_i32, %c0_i32_0 : i32, i32
  }
  func.func @transform_2(%arg0: i32) -> (i32, i32) {
    %c0_i32 = arith.constant 0 : i32
    %c0_i32_0 = arith.constant 0 : i32
    %c0_i32_1 = arith.constant 0 : i32
    return %c0_i32, %c0_i32_0 : i32, i32
  }
  func.func @transform_3(%arg0: i32) -> (i32, i32) {
    %c0_i32 = arith.constant 0 : i32
    %c0_i32_0 = arith.constant 0 : i32
    %c0_i32_1 = arith.constant 0 : i32
    return %c0_i32, %c0_i32_0 : i32, i32
  }
  func.func @transform_4(%arg0: i32) -> (i32, i32) {
    %c0_i32 = arith.constant 0 : i32
    %c0_i32_0 = arith.constant 0 : i32
    %c0_i32_1 = arith.constant 0 : i32
    return %c0_i32, %c0_i32_0 : i32, i32
  }
  func.func @transform_5(%arg0: i32) -> (i32, i32) {
    %c0_i32 = arith.constant 0 : i32
    %c0_i32_0 = arith.constant 0 : i32
    return %c0_i32, %arg0 : i32, i32
  }
}

module attributes {stable_mosaic.version = 11 : i64} {
  func.func @_nonlocal_kernel(%arg0: i32, %arg1: memref<32x128xf32, #tpu.memory_space<vmem>>, %arg2: memref<48x32xf32, #tpu.memory_space<vmem>>, %arg3: memref<48x1xf32, #tpu.memory_space<vmem>>, %arg4: memref<32x16xf32, #tpu.memory_space<vmem>>, %arg5: memref<32x1xf32, #tpu.memory_space<vmem>>, %arg6: memref<32x128xf32, #tpu.memory_space<vmem>>) attributes {dimension_semantics = [#tpu.dimension_semantics<parallel>], iteration_bounds = array<i64: 1>, scalar_prefetch = 0 : i64, scratch_operands = 0 : i64, tpu.core_type = #tpu.core_type<tc>, window_params = [{transform_indices = @transform_0, window_bounds = array<i64: 32, 128>}, {pipeline_mode = #tpu.pipeline_mode<synchronous>, transform_indices = @transform_1, window_bounds = array<i64: 48, 32>}, {pipeline_mode = #tpu.pipeline_mode<synchronous>, transform_indices = @transform_2, window_bounds = array<i64: 48, 1>}, {pipeline_mode = #tpu.pipeline_mode<synchronous>, transform_indices = @transform_3, window_bounds = array<i64: 32, 16>}, {pipeline_mode = #tpu.pipeline_mode<synchronous>, transform_indices = @transform_4, window_bounds = array<i64: 32, 1>}, {transform_indices = @transform_5, window_bounds = array<i64: 32, 128>}]} {
    %c0 = arith.constant 0 : index
    %c0_0 = arith.constant 0 : index
    %0 = vector.load %arg1[%c0, %c0_0] : memref<32x128xf32, #tpu.memory_space<vmem>>, vector<32x128xf32>
    %c0_1 = arith.constant 0 : index
    %c0_2 = arith.constant 0 : index
    %1 = vector.load %arg2[%c0_1, %c0_2] : memref<48x32xf32, #tpu.memory_space<vmem>>, vector<48x32xf32>
    %cst = arith.constant dense<0.000000e+00> : vector<48x128xf32>
    %2 = tpu.matmul %1, %0, %cst {dimension_numbers = #tpu.dot_dimension_numbers<[1], [0], [0], [1], [0, 0, 1, 1], [], []>} : vector<48x32xf32>, vector<32x128xf32>, vector<48x128xf32> -> vector<48x128xf32>
    %c0_3 = arith.constant 0 : index
    %c0_4 = arith.constant 0 : index
    %3 = vector.load %arg3[%c0_3, %c0_4] : memref<48x1xf32, #tpu.memory_space<vmem>>, vector<48x1xf32>
    %4 = vector.broadcast %3 : vector<48x1xf32> to vector<48x128xf32>
    %5 = arith.addf %2, %4 : vector<48x128xf32>
    %6 = vector.extract_strided_slice %5 {offsets = [0, 0], sizes = [16, 128], strides = [1, 1]} : vector<48x128xf32> to vector<16x128xf32>
    %7 = vector.extract_strided_slice %5 {offsets = [16, 0], sizes = [16, 128], strides = [1, 1]} : vector<48x128xf32> to vector<16x128xf32>
    %8 = vector.extract_strided_slice %5 {offsets = [32, 0], sizes = [16, 128], strides = [1, 1]} : vector<48x128xf32> to vector<16x128xf32>
    %9 = vector.extract_strided_slice %8 {offsets = [0, 0], sizes = [16, 64], strides = [1, 1]} : vector<16x128xf32> to vector<16x64xf32>
    %10 = vector.extract_strided_slice %7 {offsets = [0, 0], sizes = [16, 64], strides = [1, 1]} : vector<16x128xf32> to vector<16x64xf32>
    %11 = vector.extract_strided_slice %6 {offsets = [0, 0], sizes = [16, 64], strides = [1, 1]} : vector<16x128xf32> to vector<16x64xf32>
    %cst_5 = arith.constant dense<0.000000e+00> : vector<16x16xf32>
    %12 = tpu.matmul %9, %10, %cst_5 {dimension_numbers = #tpu.dot_dimension_numbers<[1], [1], [0], [0], [0, 0, 1, 0], [], []>} : vector<16x64xf32>, vector<16x64xf32>, vector<16x16xf32> -> vector<16x16xf32>
    %cst_6 = arith.constant dense<0.000000e+00> : vector<16x64xf32>
    %13 = tpu.matmul %12, %11, %cst_6 {dimension_numbers = #tpu.dot_dimension_numbers<[1], [0], [0], [1], [0, 0, 1, 1], [], []>} : vector<16x16xf32>, vector<16x64xf32>, vector<16x64xf32> -> vector<16x64xf32>
    %14 = vector.extract_strided_slice %8 {offsets = [0, 64], sizes = [16, 64], strides = [1, 1]} : vector<16x128xf32> to vector<16x64xf32>
    %15 = vector.extract_strided_slice %7 {offsets = [0, 64], sizes = [16, 64], strides = [1, 1]} : vector<16x128xf32> to vector<16x64xf32>
    %16 = vector.extract_strided_slice %6 {offsets = [0, 64], sizes = [16, 64], strides = [1, 1]} : vector<16x128xf32> to vector<16x64xf32>
    %cst_7 = arith.constant dense<0.000000e+00> : vector<16x16xf32>
    %17 = tpu.matmul %14, %15, %cst_7 {dimension_numbers = #tpu.dot_dimension_numbers<[1], [1], [0], [0], [0, 0, 1, 0], [], []>} : vector<16x64xf32>, vector<16x64xf32>, vector<16x16xf32> -> vector<16x16xf32>
    %cst_8 = arith.constant dense<0.000000e+00> : vector<16x64xf32>
    %18 = tpu.matmul %17, %16, %cst_8 {dimension_numbers = #tpu.dot_dimension_numbers<[1], [0], [0], [1], [0, 0, 1, 1], [], []>} : vector<16x16xf32>, vector<16x64xf32>, vector<16x64xf32> -> vector<16x64xf32>
    %19 = tpu.concatenate %13, %18 in 1 : vector<16x64xf32>, vector<16x64xf32> -> vector<16x128xf32>
    %c0_9 = arith.constant 0 : index
    %c0_10 = arith.constant 0 : index
    %20 = vector.load %arg4[%c0_9, %c0_10] : memref<32x16xf32, #tpu.memory_space<vmem>>, vector<32x16xf32>
    %cst_11 = arith.constant dense<0.000000e+00> : vector<32x128xf32>
    %21 = tpu.matmul %20, %19, %cst_11 {dimension_numbers = #tpu.dot_dimension_numbers<[1], [0], [0], [1], [0, 0, 1, 1], [], []>} : vector<32x16xf32>, vector<16x128xf32>, vector<32x128xf32> -> vector<32x128xf32>
    %c0_12 = arith.constant 0 : index
    %c0_13 = arith.constant 0 : index
    %22 = vector.load %arg5[%c0_12, %c0_13] : memref<32x1xf32, #tpu.memory_space<vmem>>, vector<32x1xf32>
    %23 = vector.broadcast %22 : vector<32x1xf32> to vector<32x128xf32>
    %24 = arith.addf %21, %23 : vector<32x128xf32>
    %25 = arith.addf %24, %0 : vector<32x128xf32>
    %c0_14 = arith.constant 0 : index
    %c0_15 = arith.constant 0 : index
    %26 = vector.load %arg6[%c0_14, %c0_15] : memref<32x128xf32, #tpu.memory_space<vmem>>, vector<32x128xf32>
    tpu.vector_store %arg6[%c0_14, %c0_15], %25 {strides = array<i32>} : memref<32x128xf32, #tpu.memory_space<vmem>>, vector<32x128xf32>,
    return
  }
  func.func @transform_0(%arg0: i32) -> (i32, i32) {
    %c0_i32 = arith.constant 0 : i32
    %c0_i32_0 = arith.constant 0 : i32
    return %c0_i32, %arg0 : i32, i32
  }
  func.func @transform_1(%arg0: i32) -> (i32, i32) {
    %c0_i32 = arith.constant 0 : i32
    %c0_i32_0 = arith.constant 0 : i32
    %c0_i32_1 = arith.constant 0 : i32
    return %c0_i32, %c0_i32_0 : i32, i32
  }
  func.func @transform_2(%arg0: i32) -> (i32, i32) {
    %c0_i32 = arith.constant 0 : i32
    %c0_i32_0 = arith.constant 0 : i32
    %c0_i32_1 = arith.constant 0 : i32
    return %c0_i32, %c0_i32_0 : i32, i32
  }
  func.func @transform_3(%arg0: i32) -> (i32, i32) {
    %c0_i32 = arith.constant 0 : i32
    %c0_i32_0 = arith.constant 0 : i32
    %c0_i32_1 = arith.constant 0 : i32
    return %c0_i32, %c0_i32_0 : i32, i32
  }
  func.func @transform_4(%arg0: i32) -> (i32, i32) {
    %c0_i32 = arith.constant 0 : i32
    %c0_i32_0 = arith.constant 0 : i32
    %c0_i32_1 = arith.constant 0 : i32
    return %c0_i32, %c0_i32_0 : i32, i32
  }
  func.func @transform_5(%arg0: i32) -> (i32, i32) {
    %c0_i32 = arith.constant 0 : i32
    %c0_i32_0 = arith.constant 0 : i32
    return %c0_i32, %arg0 : i32, i32
  }
}

</mosaic_0001>

<llo_original>
// kernel: tpu_custom_call.1
$region0: #{tpu_custom_call.1}
  #allocation0 [shape = 'u32[]', space=smem, size = 0x4, offset = 0x4, fixed_abs, tag = 'smem constant byte address 0x4 - core index']
  #allocation1 [shape = 'u32[144,128]{1,0:T(1,128)}', space=vmem, size = 0x12000, scoped, tag = 'internal scratch']
  %s0 = inlined_call_operand.vmem [shape: f32[32,128], index: 0, kind: input, shape index: {}]
  %s1 = inlined_call_operand.vmem [shape: f32[48,32], index: 1, kind: input, shape index: {}]
  %s2 = inlined_call_operand.vmem [shape: f32[48,1], index: 2, kind: input, shape index: {}]
  %s3 = inlined_call_operand.vmem [shape: f32[32,16], index: 3, kind: input, shape index: {}]
  %s4 = inlined_call_operand.vmem [shape: f32[32,1], index: 4, kind: input, shape index: {}]
  %s5 = inlined_call_operand.hbm [shape: f32[32,128], index: 5, kind: output, shape index: {}]
  %s6 = sld [smem:[#allocation0]]
  $region30: #{tpu_custom_call.1} parent=0
    _
  %s8 = ssub.s32 1, %s6
  %s9 = scalar_select 0, %s8, %s6
  $region1: #{tpu_custom_call.1} parent=0
    #allocation2 [shape = 'u8[16384]{0}', space=vmem, size = 0x4000, scoped, tag = 'output window, operand 0, single buffered']
    #allocation3 [shape = 's32[1]{0}', space=sflag, size = 0x4, scoped, tag = 'scoped memory for tpu_custom_call.1']
    %10 = vsyncpa [#allocation3], 0
    // Predicated region
    $region2: #{tpu_custom_call.1} parent=1 // pred_check
      _
    $region3: #{tpu_custom_call.1} parent=1 // pred_check_branch
      %12 = sbr.rel (0) target = $region5
    $region4: #{tpu_custom_call.1} parent=1 // pred_region
      _
    $region5: #{tpu_custom_call.1} parent=1 // pred_fallthru
      _
    // Predicated region
    $region6: #{tpu_custom_call.1} parent=1 // pred_check
      _
    $region7: #{tpu_custom_call.1} parent=1 // pred_check_branch
      %14 = sbr.rel (0) target = $region9
    $region8: #{tpu_custom_call.1} parent=1 // pred_region
      _
    $region9: #{tpu_custom_call.1} parent=1 // pred_fallthru
      _
    // Predicated region
    $region10: #{tpu_custom_call.1} parent=1 // pred_check
      _
    $region11: #{tpu_custom_call.1} parent=1 // pred_check_branch
      %16 = sbr.rel (0) target = $region13
    $region12: #{tpu_custom_call.1} parent=1 // pred_region
      _
    $region13: #{tpu_custom_call.1} parent=1 // pred_fallthru
      _
    // Predicated region
    $region14: #{tpu_custom_call.1} parent=1 // pred_check
      _
    $region15: #{tpu_custom_call.1} parent=1 // pred_check_branch
      %18 = sbr.rel (0) target = $region17
    $region16: #{tpu_custom_call.1} parent=1 // pred_region
      _
    $region17: #{tpu_custom_call.1} parent=1 // pred_fallthru
      _
    // Predicated region
    $region18: #{tpu_custom_call.1} parent=1 // pred_check
      _
    $region19: #{tpu_custom_call.1} parent=1 // pred_check_branch
      %20 = sbr.rel (0) target = $region21
    $region20: #{tpu_custom_call.1} parent=1 // pred_region
      _
    $region21: #{tpu_custom_call.1} parent=1 // pred_fallthru
      _
    %v21 = vld [vmem:[%s0] sm:$0xff]
    %v22 = vld [vmem:[%s0 + $0x8] sm:$0xff]
    %v23 = vld [vmem:[%s0 + $0x10] sm:$0xff]
    %v24 = vld [vmem:[%s0 + $0x18] sm:$0xff]
    %v25 = vld [vmem:[%s1] sm:$0xff]
    %v26 = vld [vmem:[%s1 + $0x8] sm:$0xff]
    %v27 = vld [vmem:[%s1 + $0x10] sm:$0xff]
    %v28 = vld [vmem:[%s1 + $0x18] sm:$0xff]
    %v29 = vld [vmem:[%s1 + $0x20] sm:$0xff]
    %v30 = vld [vmem:[%s1 + $0x28] sm:$0xff]
    %v31 = vld [vmem:[%s2] sm:$0xff]
    %v32 = vld [vmem:[%s2 + $0x8] sm:$0xff]
    %v33 = vld [vmem:[%s2 + $0x10] sm:$0xff]
    %v34 = vld [vmem:[%s2 + $0x18] sm:$0xff]
    %v35 = vld [vmem:[%s2 + $0x20] sm:$0xff]
    %v36 = vld [vmem:[%s2 + $0x28] sm:$0xff]
    %38 = vset.pattern.permute.xlu0 0
    %39 = vperm.xlu0 %38, %v31
    %v40 = vpop.permute.xlu0 %39
    %43 = vset.pattern.permute.xlu0 0
    %44 = vperm.xlu0 %43, %v32
    %v45 = vpop.permute.xlu0 %44
    %48 = vset.pattern.permute.xlu0 0
    %49 = vperm.xlu0 %48, %v33
    %v50 = vpop.permute.xlu0 %49
    %53 = vset.pattern.permute.xlu0 0
    %54 = vperm.xlu0 %53, %v34
    %v55 = vpop.permute.xlu0 %54
    %58 = vset.pattern.permute.xlu0 0
    %59 = vperm.xlu0 %58, %v35
    %v60 = vpop.permute.xlu0 %59
    %63 = vset.pattern.permute.xlu0 0
    %64 = vperm.xlu0 %63, %v36
    %v65 = vpop.permute.xlu0 %64
    %vm67 = vcmask 261120
    %v69 = vsel %vm67, %v25, 0
    %v72 = vsel %vm67, %v26, 0
    %v75 = vsel %vm67, %v27, 0
    %v78 = vsel %vm67, %v28, 0
    %v81 = vsel %vm67, %v29, 0
    %v84 = vsel %vm67, %v30, 0
    %86 = vmatprep.subr.mxu0 0.0
    %87 = vmatpush1.msra.mxu0 0.0
    %88 = vmatprep.subr.mxu0 0.0
    %89 = vmatpush1.msra.mxu0 0.0
    %90 = vmatprep.subr.mxu0 0.0
    %91 = vmatpush1.msra.mxu0 0.0
    %92 = vmatprep.subr.mxu0 0.0
    %93 = vmatpush1.msra.mxu0 0.0
    %94 = vmatprep.subr.mxu0 0.0
    %95 = vmatpush1.msra.mxu0 0.0
    %96 = vmatprep.subr.mxu0 0.0
    %97 = vmatpush1.msra.mxu0 0.0
    %98 = vmatprep.subr.mxu0 0.0
    %99 = vmatpush1.msra.mxu0 0.0
    %100 = vmatprep.subr.mxu0 0.0
    %101 = vmatpush1.msra.mxu0 0.0
    %102 = vmatprep.subr.mxu0 0.0
    %103 = vmatpush1.msra.mxu0 0.0
    %104 = vmatprep.subr.mxu0 0.0
    %105 = vmatpush1.msra.mxu0 0.0
    %106 = vmatprep.subr.mxu0 0.0
    %107 = vmatpush1.msra.mxu0 0.0
    %108 = vmatprep.subr.mxu0 0.0
    %109 = vmatpush1.msra.mxu0 0.0
    %110 = vmatprep.subr.mxu0 0.0
    %111 = vmatpush1.msra.mxu0 %v24
    %112 = vmatprep.subr.mxu0 0.0
    %113 = vmatpush1.msra.mxu0 %v23
    %114 = vmatprep.subr.mxu0 0.0
    %115 = vmatpush1.msra.mxu0 %v22
    %116 = vmatprep.subr.mxu0 0.0
    %117 = vmatpush1.msra.mxu0 %v21
    %118 = vmatprep.subr.mxu0 0.0
    %119 = vmatpush2.msra.mxu0 0.0
    %120 = vmatprep.subr.mxu0 0.0
    %121 = vmatpush2.msra.mxu0 0.0
    %122 = vmatprep.subr.mxu0 0.0
    %123 = vmatpush2.msra.mxu0 0.0
    %124 = vmatprep.subr.mxu0 0.0
    %125 = vmatpush2.msra.mxu0 0.0
    %126 = vmatprep.subr.mxu0 0.0
    %127 = vmatpush2.msra.mxu0 0.0
    %128 = vmatprep.subr.mxu0 0.0
    %129 = vmatpush2.msra.mxu0 0.0
    %130 = vmatprep.subr.mxu0 0.0
    %131 = vmatpush2.msra.mxu0 0.0
    %132 = vmatprep.subr.mxu0 0.0
    %133 = vmatpush2.msra.mxu0 0.0
    %134 = vmatprep.subr.mxu0 0.0
    %135 = vmatpush2.msra.mxu0 0.0
    %136 = vmatprep.subr.mxu0 0.0
    %137 = vmatpush2.msra.mxu0 0.0
    %138 = vmatprep.subr.mxu0 0.0
    %139 = vmatpush2.msra.mxu0 0.0
    %140 = vmatprep.subr.mxu0 0.0
    %141 = vmatpush2.msra.mxu0 0.0
    %142 = vmatprep.subr.mxu0 0.0
    %143 = vmatpush2.msra.mxu0 0.0
    %144 = vmatprep.subr.mxu0 0.0
    %145 = vmatpush2.msra.mxu0 0.0
    %146 = vmatprep.subr.mxu0 0.0
    %147 = vmatpush2.msra.mxu0 0.0
    %148 = vmatprep.subr.mxu0 0.0
    %149 = vmatpush2.msra.mxu0 0.0
    %150 = vmatprep.mubr.f32.mxu0 0.0
    %151 = vmatmul.mubr.f32.gmra.mxu0 %v69
    %v152 = vpop.f32.mrf.mxu0
    %v153 = vadd.f32 %v40, %v152
    %v154 = vpop.f32.mrf.mxu0
    %155 = vmatprep.mubr.f32.mxu0 0.0
    %156 = vmatmul.mubr.f32.gmra.mxu0 %v72
    %v157 = vpop.f32.mrf.mxu0
    %v158 = vadd.f32 %v45, %v157
    %v159 = vpop.f32.mrf.mxu0
    %160 = vmatprep.mubr.f32.mxu0 0.0
    %161 = vmatmul.mubr.f32.gmra.mxu0 %v75
    %v162 = vpop.f32.mrf.mxu0
    %v163 = vadd.f32 %v50, %v162
    %v164 = vpop.f32.mrf.mxu0
    %165 = vmatprep.mubr.f32.mxu0 0.0
    %166 = vmatmul.mubr.f32.gmra.mxu0 %v78
    %v167 = vpop.f32.mrf.mxu0
    %v168 = vadd.f32 %v55, %v167
    %v169 = vpop.f32.mrf.mxu0
    %170 = vmatprep.mubr.f32.mxu0 0.0
    %171 = vmatmul.mubr.f32.gmra.mxu0 %v81
    %v172 = vpop.f32.mrf.mxu0
    %v173 = vadd.f32 %v60, %v172
    %v174 = vpop.f32.mrf.mxu0
    %175 = vmatprep.mubr.f32.mxu0 0.0
    %176 = vmatmul.mubr.f32.gmra.mxu0 %v84
    %v177 = vpop.f32.mrf.mxu0
    %v178 = vadd.f32 %v65, %v177
    %v179 = vpop.f32.mrf.mxu0
    %180 = vdwg.mxu0
    %vm181 = vcmask 523264
    %v183 = vsel %vm181, %v173, 0
    %v186 = vsel %vm181, %v178, 0
    %v189 = vsel %vm181, %v163, 0
    %v192 = vsel %vm181, %v168, 0
    %194 = vmatprep.subr.mxu0 0.0
    %195 = vmatpush1.xpose.msra.mxu0 0.0
    %196 = vmatprep.subr.mxu0 0.0
    %197 = vmatpush1.xpose.msra.mxu0 0.0
    %198 = vmatprep.subr.mxu0 0.0
    %199 = vmatpush1.xpose.msra.mxu0 0.0
    %200 = vmatprep.subr.mxu0 0.0
    %201 = vmatpush1.xpose.msra.mxu0 0.0
    %202 = vmatprep.subr.mxu0 0.0
    %203 = vmatpush1.xpose.msra.mxu0 0.0
    %204 = vmatprep.subr.mxu0 0.0
    %205 = vmatpush1.xpose.msra.mxu0 0.0
    %206 = vmatprep.subr.mxu0 0.0
    %207 = vmatpush1.xpose.msra.mxu0 0.0
    %208 = vmatprep.subr.mxu0 0.0
    %209 = vmatpush1.xpose.msra.mxu0 0.0
    %210 = vmatprep.subr.mxu0 0.0
    %211 = vmatpush1.xpose.msra.mxu0 0.0
    %212 = vmatprep.subr.mxu0 0.0
    %213 = vmatpush1.xpose.msra.mxu0 0.0
    %214 = vmatprep.subr.mxu0 0.0
    %215 = vmatpush1.xpose.msra.mxu0 0.0
    %216 = vmatprep.subr.mxu0 0.0
    %217 = vmatpush1.xpose.msra.mxu0 0.0
    %218 = vmatprep.subr.mxu0 0.0
    %219 = vmatpush1.xpose.msra.mxu0 0.0
    %220 = vmatprep.subr.mxu0 0.0
    %221 = vmatpush1.xpose.msra.mxu0 0.0
    %222 = vmatprep.subr.mxu0 0.0
    %223 = vmatpush1.xpose.msra.mxu0 %v192
    %224 = vmatprep.subr.mxu0 0.0
    %225 = vmatpush1.xpose.msra.mxu0 %v189
    %226 = vmatprep.subr.mxu0 0.0
    %227 = vmatpush2.xpose.msra.mxu0 0.0
    %228 = vmatprep.subr.mxu0 0.0
    %229 = vmatpush2.xpose.msra.mxu0 0.0
    %230 = vmatprep.subr.mxu0 0.0
    %231 = vmatpush2.xpose.msra.mxu0 0.0
    %232 = vmatprep.subr.mxu0 0.0
    %233 = vmatpush2.xpose.msra.mxu0 0.0
    %234 = vmatprep.subr.mxu0 0.0
    %235 = vmatpush2.xpose.msra.mxu0 0.0
    %236 = vmatprep.subr.mxu0 0.0
    %237 = vmatpush2.xpose.msra.mxu0 0.0
    %238 = vmatprep.subr.mxu0 0.0
    %239 = vmatpush2.xpose.msra.mxu0 0.0
    %240 = vmatprep.subr.mxu0 0.0
    %241 = vmatpush2.xpose.msra.mxu0 0.0
    %242 = vmatprep.subr.mxu0 0.0
    %243 = vmatpush2.xpose.msra.mxu0 0.0
    %244 = vmatprep.subr.mxu0 0.0
    %245 = vmatpush2.xpose.msra.mxu0 0.0
    %246 = vmatprep.subr.mxu0 0.0
    %247 = vmatpush2.xpose.msra.mxu0 0.0
    %248 = vmatprep.subr.mxu0 0.0
    %249 = vmatpush2.xpose.msra.mxu0 0.0
    %250 = vmatprep.subr.mxu0 0.0
    %251 = vmatpush2.xpose.msra.mxu0 0.0
    %252 = vmatprep.subr.mxu0 0.0
    %253 = vmatpush2.xpose.msra.mxu0 0.0
    %254 = vmatprep.subr.mxu0 0.0
    %255 = vmatpush2.xpose.msra.mxu0 0.0
    %256 = vmatprep.subr.mxu0 0.0
    %257 = vmatpush2.xpose.msra.mxu0 0.0
    %258 = vmatprep.mubr.f32.mxu0 0.0
    %259 = vmatmul.mubr.f32.gmra.mxu0 %v183
    %v260 = vpop.f32.mrf.mxu0
    %v261 = vadd.f32 0.0, %v260
    %v262 = vpop.f32.mrf.mxu0
    %263 = vmatprep.mubr.f32.mxu0 0.0
    %264 = vmatmul.mubr.f32.gmra.mxu0 %v186
    %v265 = vpop.f32.mrf.mxu0
    %v266 = vadd.f32 0.0, %v265
    %v267 = vpop.f32.mrf.mxu0
    %268 = vdwg.mxu0
    %vm269 = vcmask 130048
    %v271 = vsel %vm269, %v261, 0
    %v274 = vsel %vm269, %v266, 0
    %276 = vmatprep.subr.mxu0 0.0
    %277 = vmatpush1.msra.mxu0 0.0
    %278 = vmatprep.subr.mxu0 0.0
    %279 = vmatpush1.msra.mxu0 0.0
    %280 = vmatprep.subr.mxu0 0.0
    %281 = vmatpush1.msra.mxu0 0.0
    %282 = vmatprep.subr.mxu0 0.0
    %283 = vmatpush1.msra.mxu0 0.0
    %284 = vmatprep.subr.mxu0 0.0
    %285 = vmatpush1.msra.mxu0 0.0
    %286 = vmatprep.subr.mxu0 0.0
    %287 = vmatpush1.msra.mxu0 0.0
    %288 = vmatprep.subr.mxu0 0.0
    %289 = vmatpush1.msra.mxu0 0.0
    %290 = vmatprep.subr.mxu0 0.0
    %291 = vmatpush1.msra.mxu0 0.0
    %292 = vmatprep.subr.mxu0 0.0
    %293 = vmatpush1.msra.mxu0 0.0
    %294 = vmatprep.subr.mxu0 0.0
    %295 = vmatpush1.msra.mxu0 0.0
    %296 = vmatprep.subr.mxu0 0.0
    %297 = vmatpush1.msra.mxu0 0.0
    %298 = vmatprep.subr.mxu0 0.0
    %299 = vmatpush1.msra.mxu0 0.0
    %300 = vmatprep.subr.mxu0 0.0
    %301 = vmatpush1.msra.mxu0 0.0
    %302 = vmatprep.subr.mxu0 0.0
    %303 = vmatpush1.msra.mxu0 0.0
    %304 = vmatprep.subr.mxu0 0.0
    %305 = vmatpush1.msra.mxu0 %v158
    %306 = vmatprep.subr.mxu0 0.0
    %307 = vmatpush1.msra.mxu0 %v153
    %308 = vmatprep.subr.mxu0 0.0
    %309 = vmatpush2.msra.mxu0 0.0
    %310 = vmatprep.subr.mxu0 0.0
    %311 = vmatpush2.msra.mxu0 0.0
    %312 = vmatprep.subr.mxu0 0.0
    %313 = vmatpush2.msra.mxu0 0.0
    %314 = vmatprep.subr.mxu0 0.0
    %315 = vmatpush2.msra.mxu0 0.0
    %316 = vmatprep.subr.mxu0 0.0
    %317 = vmatpush2.msra.mxu0 0.0
    %318 = vmatprep.subr.mxu0 0.0
    %319 = vmatpush2.msra.mxu0 0.0
    %320 = vmatprep.subr.mxu0 0.0
    %321 = vmatpush2.msra.mxu0 0.0
    %322 = vmatprep.subr.mxu0 0.0
    %323 = vmatpush2.msra.mxu0 0.0
    %324 = vmatprep.subr.mxu0 0.0
    %325 = vmatpush2.msra.mxu0 0.0
    %326 = vmatprep.subr.mxu0 0.0
    %327 = vmatpush2.msra.mxu0 0.0
    %328 = vmatprep.subr.mxu0 0.0
    %329 = vmatpush2.msra.mxu0 0.0
    %330 = vmatprep.subr.mxu0 0.0
    %331 = vmatpush2.msra.mxu0 0.0
    %332 = vmatprep.subr.mxu0 0.0
    %333 = vmatpush2.msra.mxu0 0.0
    %334 = vmatprep.subr.mxu0 0.0
    %335 = vmatpush2.msra.mxu0 0.0
    %336 = vmatprep.subr.mxu0 0.0
    %337 = vmatpush2.msra.mxu0 0.0
    %338 = vmatprep.subr.mxu0 0.0
    %339 = vmatpush2.msra.mxu0 0.0
    %340 = vmatprep.mubr.f32.mxu0 0.0
    %341 = vmatmul.mubr.f32.gmra.mxu0 %v271
    %v342 = vpop.f32.mrf.mxu0
    %v343 = vadd.f32 0.0, %v342
    %v344 = vpop.f32.mrf.mxu0
    %345 = vmatprep.mubr.f32.mxu0 0.0
    %346 = vmatmul.mubr.f32.gmra.mxu0 %v274
    %v347 = vpop.f32.mrf.mxu0
    %v348 = vadd.f32 0.0, %v347
    %v349 = vpop.f32.mrf.mxu0
    %350 = vdwg.mxu0
    %351 = vrot.lane.b32.xlu0 %v173, 64
    %v352 = vpop.permute.xlu0 %351
    %353 = vrot.lane.b32.xlu0 %v178, 64
    %v354 = vpop.permute.xlu0 %353
    %355 = vrot.lane.b32.xlu0 %v163, 64
    %v356 = vpop.permute.xlu0 %355
    %357 = vrot.lane.b32.xlu0 %v168, 64
    %v358 = vpop.permute.xlu0 %357
    %v359 = vsel %vm181, %v352, 0
    %v361 = vsel %vm181, %v354, 0
    %v363 = vsel %vm181, %v356, 0
    %v365 = vsel %vm181, %v358, 0
    %367 = vmatprep.subr.mxu0 0.0
    %368 = vmatpush1.xpose.msra.mxu0 0.0
    %369 = vmatprep.subr.mxu0 0.0
    %370 = vmatpush1.xpose.msra.mxu0 0.0
    %371 = vmatprep.subr.mxu0 0.0
    %372 = vmatpush1.xpose.msra.mxu0 0.0
    %373 = vmatprep.subr.mxu0 0.0
    %374 = vmatpush1.xpose.msra.mxu0 0.0
    %375 = vmatprep.subr.mxu0 0.0
    %376 = vmatpush1.xpose.msra.mxu0 0.0
    %377 = vmatprep.subr.mxu0 0.0
    %378 = vmatpush1.xpose.msra.mxu0 0.0
    %379 = vmatprep.subr.mxu0 0.0
    %380 = vmatpush1.xpose.msra.mxu0 0.0
    %381 = vmatprep.subr.mxu0 0.0
    %382 = vmatpush1.xpose.msra.mxu0 0.0
    %383 = vmatprep.subr.mxu0 0.0
    %384 = vmatpush1.xpose.msra.mxu0 0.0
    %385 = vmatprep.subr.mxu0 0.0
    %386 = vmatpush1.xpose.msra.mxu0 0.0
    %387 = vmatprep.subr.mxu0 0.0
    %388 = vmatpush1.xpose.msra.mxu0 0.0
    %389 = vmatprep.subr.mxu0 0.0
    %390 = vmatpush1.xpose.msra.mxu0 0.0
    %391 = vmatprep.subr.mxu0 0.0
    %392 = vmatpush1.xpose.msra.mxu0 0.0
    %393 = vmatprep.subr.mxu0 0.0
    %394 = vmatpush1.xpose.msra.mxu0 0.0
    %395 = vmatprep.subr.mxu0 0.0
    %396 = vmatpush1.xpose.msra.mxu0 %v365
    %397 = vmatprep.subr.mxu0 0.0
    %398 = vmatpush1.xpose.msra.mxu0 %v363
    %399 = vmatprep.subr.mxu0 0.0
    %400 = vmatpush2.xpose.msra.mxu0 0.0
    %401 = vmatprep.subr.mxu0 0.0
    %402 = vmatpush2.xpose.msra.mxu0 0.0
    %403 = vmatprep.subr.mxu0 0.0
    %404 = vmatpush2.xpose.msra.mxu0 0.0
    %405 = vmatprep.subr.mxu0 0.0
    %406 = vmatpush2.xpose.msra.mxu0 0.0
    %407 = vmatprep.subr.mxu0 0.0
    %408 = vmatpush2.xpose.msra.mxu0 0.0
    %409 = vmatprep.subr.mxu0 0.0
    %410 = vmatpush2.xpose.msra.mxu0 0.0
    %411 = vmatprep.subr.mxu0 0.0
    %412 = vmatpush2.xpose.msra.mxu0 0.0
    %413 = vmatprep.subr.mxu0 0.0
    %414 = vmatpush2.xpose.msra.mxu0 0.0
    %415 = vmatprep.subr.mxu0 0.0
    %416 = vmatpush2.xpose.msra.mxu0 0.0
    %417 = vmatprep.subr.mxu0 0.0
    %418 = vmatpush2.xpose.msra.mxu0 0.0
    %419 = vmatprep.subr.mxu0 0.0
    %420 = vmatpush2.xpose.msra.mxu0 0.0
    %421 = vmatprep.subr.mxu0 0.0
    %422 = vmatpush2.xpose.msra.mxu0 0.0
    %423 = vmatprep.subr.mxu0 0.0
    %424 = vmatpush2.xpose.msra.mxu0 0.0
    %425 = vmatprep.subr.mxu0 0.0
    %426 = vmatpush2.xpose.msra.mxu0 0.0
    %427 = vmatprep.subr.mxu0 0.0
    %428 = vmatpush2.xpose.msra.mxu0 0.0
    %429 = vmatprep.subr.mxu0 0.0
    %430 = vmatpush2.xpose.msra.mxu0 0.0
    %431 = vmatprep.mubr.f32.mxu0 0.0
    %432 = vmatmul.mubr.f32.gmra.mxu0 %v359
    %v433 = vpop.f32.mrf.mxu0
    %v434 = vadd.f32 0.0, %v433
    %v435 = vpop.f32.mrf.mxu0
    %436 = vmatprep.mubr.f32.mxu0 0.0
    %437 = vmatmul.mubr.f32.gmra.mxu0 %v361
    %v438 = vpop.f32.mrf.mxu0
    %v439 = vadd.f32 0.0, %v438
    %v440 = vpop.f32.mrf.mxu0
    %441 = vdwg.mxu0
    %444 = vrot.lane.b32.xlu0 %v153, 64
    %v445 = vpop.permute.xlu0 %444
    %446 = vrot.lane.b32.xlu0 %v158, 64
    %v447 = vpop.permute.xlu0 %446
    %v451 = vsel %vm269, %v434, 0
    %v454 = vsel %vm269, %v439, 0
    %456 = vmatprep.subr.mxu0 0.0
    %457 = vmatpush1.msra.mxu0 0.0
    %458 = vmatprep.subr.mxu0 0.0
    %459 = vmatpush1.msra.mxu0 0.0
    %460 = vmatprep.subr.mxu0 0.0
    %461 = vmatpush1.msra.mxu0 0.0
    %462 = vmatprep.subr.mxu0 0.0
    %463 = vmatpush1.msra.mxu0 0.0
    %464 = vmatprep.subr.mxu0 0.0
    %465 = vmatpush1.msra.mxu0 0.0
    %466 = vmatprep.subr.mxu0 0.0
    %467 = vmatpush1.msra.mxu0 0.0
    %468 = vmatprep.subr.mxu0 0.0
    %469 = vmatpush1.msra.mxu0 0.0
    %470 = vmatprep.subr.mxu0 0.0
    %471 = vmatpush1.msra.mxu0 0.0
    %472 = vmatprep.subr.mxu0 0.0
    %473 = vmatpush1.msra.mxu0 0.0
    %474 = vmatprep.subr.mxu0 0.0
    %475 = vmatpush1.msra.mxu0 0.0
    %476 = vmatprep.subr.mxu0 0.0
    %477 = vmatpush1.msra.mxu0 0.0
    %478 = vmatprep.subr.mxu0 0.0
    %479 = vmatpush1.msra.mxu0 0.0
    %480 = vmatprep.subr.mxu0 0.0
    %481 = vmatpush1.msra.mxu0 0.0
    %482 = vmatprep.subr.mxu0 0.0
    %483 = vmatpush1.msra.mxu0 0.0
    %484 = vmatprep.subr.mxu0 0.0
    %485 = vmatpush1.msra.mxu0 %v447
    %486 = vmatprep.subr.mxu0 0.0
    %487 = vmatpush1.msra.mxu0 %v445
    %488 = vmatprep.subr.mxu0 0.0
    %489 = vmatpush2.msra.mxu0 0.0
    %490 = vmatprep.subr.mxu0 0.0
    %491 = vmatpush2.msra.mxu0 0.0
    %492 = vmatprep.subr.mxu0 0.0
    %493 = vmatpush2.msra.mxu0 0.0
    %494 = vmatprep.subr.mxu0 0.0
    %495 = vmatpush2.msra.mxu0 0.0
    %496 = vmatprep.subr.mxu0 0.0
    %497 = vmatpush2.msra.mxu0 0.0
    %498 = vmatprep.subr.mxu0 0.0
    %499 = vmatpush2.msra.mxu0 0.0
    %500 = vmatprep.subr.mxu0 0.0
    %501 = vmatpush2.msra.mxu0 0.0
    %502 = vmatprep.subr.mxu0 0.0
    %503 = vmatpush2.msra.mxu0 0.0
    %504 = vmatprep.subr.mxu0 0.0
    %505 = vmatpush2.msra.mxu0 0.0
    %506 = vmatprep.subr.mxu0 0.0
    %507 = vmatpush2.msra.mxu0 0.0
    %508 = vmatprep.subr.mxu0 0.0
    %509 = vmatpush2.msra.mxu0 0.0
    %510 = vmatprep.subr.mxu0 0.0
    %511 = vmatpush2.msra.mxu0 0.0
    %512 = vmatprep.subr.mxu0 0.0
    %513 = vmatpush2.msra.mxu0 0.0
    %514 = vmatprep.subr.mxu0 0.0
    %515 = vmatpush2.msra.mxu0 0.0
    %516 = vmatprep.subr.mxu0 0.0
    %517 = vmatpush2.msra.mxu0 0.0
    %518 = vmatprep.subr.mxu0 0.0
    %519 = vmatpush2.msra.mxu0 0.0
    %520 = vmatprep.mubr.f32.mxu0 0.0
    %521 = vmatmul.mubr.f32.gmra.mxu0 %v451
    %v522 = vpop.f32.mrf.mxu0
    %v523 = vadd.f32 0.0, %v522
    %v524 = vpop.f32.mrf.mxu0
    %525 = vmatprep.mubr.f32.mxu0 0.0
    %526 = vmatmul.mubr.f32.gmra.mxu0 %v454
    %v527 = vpop.f32.mrf.mxu0
    %v528 = vadd.f32 0.0, %v527
    %v529 = vpop.f32.mrf.mxu0
    %530 = vdwg.mxu0
    %533 = vrot.lane.b32.xlu0 %v523, 64
    %v534 = vpop.permute.xlu0 %533
    %535 = vrot.lane.b32.xlu0 %v528, 64
    %v536 = vpop.permute.xlu0 %535
    %v539 = vsel %vm181, %v343, %v534
    %v540 = vsel %vm181, %v348, %v536
    %v541 = vld [vmem:[%s3] sm:$0xff]
    %v542 = vld [vmem:[%s3 + $0x8] sm:$0xff]
    %v543 = vld [vmem:[%s3 + $0x10] sm:$0xff]
    %v544 = vld [vmem:[%s3 + $0x18] sm:$0xff]
    %v545 = vld [vmem:[%s4] sm:$0xff]
    %v546 = vld [vmem:[%s4 + $0x8] sm:$0xff]
    %v547 = vld [vmem:[%s4 + $0x10] sm:$0xff]
    %v548 = vld [vmem:[%s4 + $0x18] sm:$0xff]
    %550 = vset.pattern.permute.xlu0 0
    %551 = vperm.xlu0 %550, %v545
    %v552 = vpop.permute.xlu0 %551
    %555 = vset.pattern.permute.xlu0 0
    %556 = vperm.xlu0 %555, %v546
    %v557 = vpop.permute.xlu0 %556
    %560 = vset.pattern.permute.xlu0 0
    %561 = vperm.xlu0 %560, %v547
    %v562 = vpop.permute.xlu0 %561
    %565 = vset.pattern.permute.xlu0 0
    %566 = vperm.xlu0 %565, %v548
    %v567 = vpop.permute.xlu0 %566
    %v570 = vsel %vm269, %v541, 0
    %v573 = vsel %vm269, %v542, 0
    %v576 = vsel %vm269, %v543, 0
    %v579 = vsel %vm269, %v544, 0
    %581 = vmatprep.subr.mxu0 0.0
    %582 = vmatpush1.msra.mxu0 0.0
    %583 = vmatprep.subr.mxu0 0.0
    %584 = vmatpush1.msra.mxu0 0.0
    %585 = vmatprep.subr.mxu0 0.0
    %586 = vmatpush1.msra.mxu0 0.0
    %587 = vmatprep.subr.mxu0 0.0
    %588 = vmatpush1.msra.mxu0 0.0
    %589 = vmatprep.subr.mxu0 0.0
    %590 = vmatpush1.msra.mxu0 0.0
    %591 = vmatprep.subr.mxu0 0.0
    %592 = vmatpush1.msra.mxu0 0.0
    %593 = vmatprep.subr.mxu0 0.0
    %594 = vmatpush1.msra.mxu0 0.0
    %595 = vmatprep.subr.mxu0 0.0
    %596 = vmatpush1.msra.mxu0 0.0
    %597 = vmatprep.subr.mxu0 0.0
    %598 = vmatpush1.msra.mxu0 0.0
    %599 = vmatprep.subr.mxu0 0.0
    %600 = vmatpush1.msra.mxu0 0.0
    %601 = vmatprep.subr.mxu0 0.0
    %602 = vmatpush1.msra.mxu0 0.0
    %603 = vmatprep.subr.mxu0 0.0
    %604 = vmatpush1.msra.mxu0 0.0
    %605 = vmatprep.subr.mxu0 0.0
    %606 = vmatpush1.msra.mxu0 0.0
    %607 = vmatprep.subr.mxu0 0.0
    %608 = vmatpush1.msra.mxu0 0.0
    %609 = vmatprep.subr.mxu0 0.0
    %610 = vmatpush1.msra.mxu0 %v540
    %611 = vmatprep.subr.mxu0 0.0
    %612 = vmatpush1.msra.mxu0 %v539
    %613 = vmatprep.subr.mxu0 0.0
    %614 = vmatpush2.msra.mxu0 0.0
    %615 = vmatprep.subr.mxu0 0.0
    %616 = vmatpush2.msra.mxu0 0.0
    %617 = vmatprep.subr.mxu0 0.0
    %618 = vmatpush2.msra.mxu0 0.0
    %619 = vmatprep.subr.mxu0 0.0
    %620 = vmatpush2.msra.mxu0 0.0
    %621 = vmatprep.subr.mxu0 0.0
    %622 = vmatpush2.msra.mxu0 0.0
    %623 = vmatprep.subr.mxu0 0.0
    %624 = vmatpush2.msra.mxu0 0.0
    %625 = vmatprep.subr.mxu0 0.0
    %626 = vmatpush2.msra.mxu0 0.0
    %627 = vmatprep.subr.mxu0 0.0
    %628 = vmatpush2.msra.mxu0 0.0
    %629 = vmatprep.subr.mxu0 0.0
    %630 = vmatpush2.msra.mxu0 0.0
    %631 = vmatprep.subr.mxu0 0.0
    %632 = vmatpush2.msra.mxu0 0.0
    %633 = vmatprep.subr.mxu0 0.0
    %634 = vmatpush2.msra.mxu0 0.0
    %635 = vmatprep.subr.mxu0 0.0
    %636 = vmatpush2.msra.mxu0 0.0
    %637 = vmatprep.subr.mxu0 0.0
    %638 = vmatpush2.msra.mxu0 0.0
    %639 = vmatprep.subr.mxu0 0.0
    %640 = vmatpush2.msra.mxu0 0.0
    %641 = vmatprep.subr.mxu0 0.0
    %642 = vmatpush2.msra.mxu0 0.0
    %643 = vmatprep.subr.mxu0 0.0
    %644 = vmatpush2.msra.mxu0 0.0
    %645 = vmatprep.mubr.f32.mxu0 0.0
    %646 = vmatmul.mubr.f32.gmra.mxu0 %v570
    %v647 = vpop.f32.mrf.mxu0
    %v648 = vadd.f32 %v552, %v647
    %v649 = vpop.f32.mrf.mxu0
    %650 = vmatprep.mubr.f32.mxu0 0.0
    %651 = vmatmul.mubr.f32.gmra.mxu0 %v573
    %v652 = vpop.f32.mrf.mxu0
    %v653 = vadd.f32 %v557, %v652
    %v654 = vpop.f32.mrf.mxu0
    %655 = vmatprep.mubr.f32.mxu0 0.0
    %656 = vmatmul.mubr.f32.gmra.mxu0 %v576
    %v657 = vpop.f32.mrf.mxu0
    %v658 = vadd.f32 %v562, %v657
    %v659 = vpop.f32.mrf.mxu0
    %660 = vmatprep.mubr.f32.mxu0 0.0
    %661 = vmatmul.mubr.f32.gmra.mxu0 %v579
    %v662 = vpop.f32.mrf.mxu0
    %v663 = vadd.f32 %v567, %v662
    %v664 = vpop.f32.mrf.mxu0
    %665 = vdwg.mxu0
    %v666 = vadd.f32 %v648, %v21
    %v667 = vadd.f32 %v653, %v22
    %v668 = vadd.f32 %v658, %v23
    %v669 = vadd.f32 %v663, %v24
    %670 = vst [vmem:[#allocation2] sm:$0xff] %v666
    %671 = vst [vmem:[#allocation2 + $0x8] sm:$0xff] %v667
    %672 = vst [vmem:[#allocation2 + $0x10] sm:$0xff] %v668
    %673 = vst [vmem:[#allocation2 + $0x18] sm:$0xff] %v669
    // Predicated region
    $region22: #{tpu_custom_call.1} parent=1 // pred_check
      _
    $region23: #{tpu_custom_call.1} parent=1 // pred_check_branch
      %675 = sbr.rel (0) target = $region25
    $region24: #{tpu_custom_call.1} parent=1 // pred_region
      %s677 = ssub.s32 512, 512
      %678 = vsyncadd [#allocation3], %s677
      %s679 = sshll.u32 [#allocation2], 4
      %s680 = int_to_ptr.vmem [resolvable:$true] %s679
      %685 = dma.vmem_to_hbm [thread:$0]  %s680, 512, %s5, [#allocation3], 128, 128, 8
    $region25: #{tpu_custom_call.1} parent=1 // pred_fallthru
      _
    // Predicated region
    $region26: #{tpu_custom_call.1} parent=1 // pred_check
      _
    $region27: #{tpu_custom_call.1} parent=1 // pred_check_branch
      %687 = sbr.rel (0) target = $region29
    $region28: #{tpu_custom_call.1} parent=1 // pred_region
      %688 = dma.done [#allocation3], 512
    $region29: #{tpu_custom_call.1} parent=1 // pred_fallthru
      _
    %689 = vsyncpa [#allocation3], 1

// kernel: tpu_custom_call.1
$region0: #{tpu_custom_call.1}
  #allocation0 [shape = 'u32[]', space=smem, size = 0x4, offset = 0x4, fixed_abs, tag = 'smem constant byte address 0x4 - core index']
  #allocation1 [shape = 'u32[144,128]{1,0:T(1,128)}', space=vmem, size = 0x12000, scoped, tag = 'internal scratch']
  %s0 = inlined_call_operand.vmem [shape: f32[32,128], index: 0, kind: input, shape index: {}]
  %s1 = inlined_call_operand.vmem [shape: f32[48,32], index: 1, kind: input, shape index: {}]
  %s2 = inlined_call_operand.vmem [shape: f32[48,1], index: 2, kind: input, shape index: {}]
  %s3 = inlined_call_operand.vmem [shape: f32[32,16], index: 3, kind: input, shape index: {}]
  %s4 = inlined_call_operand.vmem [shape: f32[32,1], index: 4, kind: input, shape index: {}]
  %s5 = inlined_call_operand.hbm [shape: f32[32,128], index: 5, kind: output, shape index: {}]
  %s6 = sld [smem:[#allocation0]]
  $region30: #{tpu_custom_call.1} parent=0
    _
  %s8 = ssub.s32 1, %s6
  %s9 = scalar_select 0, %s8, %s6
  $region1: #{tpu_custom_call.1} parent=0
    #allocation2 [shape = 'u8[16384]{0}', space=vmem, size = 0x4000, scoped, tag = 'output window, operand 0, single buffered']
    #allocation3 [shape = 's32[1]{0}', space=sflag, size = 0x4, scoped, tag = 'scoped memory for tpu_custom_call.1']
    %10 = vsyncpa [#allocation3], 0
    // Predicated region
    $region2: #{tpu_custom_call.1} parent=1 // pred_check
      _
    $region3: #{tpu_custom_call.1} parent=1 // pred_check_branch
      %12 = sbr.rel (0) target = $region5
    $region4: #{tpu_custom_call.1} parent=1 // pred_region
      _
    $region5: #{tpu_custom_call.1} parent=1 // pred_fallthru
      _
    // Predicated region
    $region6: #{tpu_custom_call.1} parent=1 // pred_check
      _
    $region7: #{tpu_custom_call.1} parent=1 // pred_check_branch
      %14 = sbr.rel (0) target = $region9
    $region8: #{tpu_custom_call.1} parent=1 // pred_region
      _
    $region9: #{tpu_custom_call.1} parent=1 // pred_fallthru
      _
    // Predicated region
    $region10: #{tpu_custom_call.1} parent=1 // pred_check
      _
    $region11: #{tpu_custom_call.1} parent=1 // pred_check_branch
      %16 = sbr.rel (0) target = $region13
    $region12: #{tpu_custom_call.1} parent=1 // pred_region
      _
    $region13: #{tpu_custom_call.1} parent=1 // pred_fallthru
      _
    // Predicated region
    $region14: #{tpu_custom_call.1} parent=1 // pred_check
      _
    $region15: #{tpu_custom_call.1} parent=1 // pred_check_branch
      %18 = sbr.rel (0) target = $region17
    $region16: #{tpu_custom_call.1} parent=1 // pred_region
      _
    $region17: #{tpu_custom_call.1} parent=1 // pred_fallthru
      _
    // Predicated region
    $region18: #{tpu_custom_call.1} parent=1 // pred_check
      _
    $region19: #{tpu_custom_call.1} parent=1 // pred_check_branch
      %20 = sbr.rel (0) target = $region21
    $region20: #{tpu_custom_call.1} parent=1 // pred_region
      _
    $region21: #{tpu_custom_call.1} parent=1 // pred_fallthru
      _
    %v21 = vld [vmem:[%s0] sm:$0xff]
    %v22 = vld [vmem:[%s0 + $0x8] sm:$0xff]
    %v23 = vld [vmem:[%s0 + $0x10] sm:$0xff]
    %v24 = vld [vmem:[%s0 + $0x18] sm:$0xff]
    %v25 = vld [vmem:[%s1] sm:$0xff]
    %v26 = vld [vmem:[%s1 + $0x8] sm:$0xff]
    %v27 = vld [vmem:[%s1 + $0x10] sm:$0xff]
    %v28 = vld [vmem:[%s1 + $0x18] sm:$0xff]
    %v29 = vld [vmem:[%s1 + $0x20] sm:$0xff]
    %v30 = vld [vmem:[%s1 + $0x28] sm:$0xff]
    %v31 = vld [vmem:[%s2] sm:$0xff]
    %v32 = vld [vmem:[%s2 + $0x8] sm:$0xff]
    %v33 = vld [vmem:[%s2 + $0x10] sm:$0xff]
    %v34 = vld [vmem:[%s2 + $0x18] sm:$0xff]
    %v35 = vld [vmem:[%s2 + $0x20] sm:$0xff]
    %v36 = vld [vmem:[%s2 + $0x28] sm:$0xff]
    %38 = vset.pattern.permute.xlu0 0
    %39 = vperm.xlu0 %38, %v31
    %v40 = vpop.permute.xlu0 %39
    %43 = vset.pattern.permute.xlu0 0
    %44 = vperm.xlu0 %43, %v32
    %v45 = vpop.permute.xlu0 %44
    %48 = vset.pattern.permute.xlu0 0
    %49 = vperm.xlu0 %48, %v33
    %v50 = vpop.permute.xlu0 %49
    %53 = vset.pattern.permute.xlu0 0
    %54 = vperm.xlu0 %53, %v34
    %v55 = vpop.permute.xlu0 %54
    %58 = vset.pattern.permute.xlu0 0
    %59 = vperm.xlu0 %58, %v35
    %v60 = vpop.permute.xlu0 %59
    %63 = vset.pattern.permute.xlu0 0
    %64 = vperm.xlu0 %63, %v36
    %v65 = vpop.permute.xlu0 %64
    %vm67 = vcmask 261120
    %v69 = vsel %vm67, %v25, 0
    %v72 = vsel %vm67, %v26, 0
    %v75 = vsel %vm67, %v27, 0
    %v78 = vsel %vm67, %v28, 0
    %v81 = vsel %vm67, %v29, 0
    %v84 = vsel %vm67, %v30, 0
    %86 = vmatprep.subr.mxu0 0.0
    %87 = vmatpush1.msra.mxu0 0.0
    %88 = vmatprep.subr.mxu0 0.0
    %89 = vmatpush1.msra.mxu0 0.0
    %90 = vmatprep.subr.mxu0 0.0
    %91 = vmatpush1.msra.mxu0 0.0
    %92 = vmatprep.subr.mxu0 0.0
    %93 = vmatpush1.msra.mxu0 0.0
    %94 = vmatprep.subr.mxu0 0.0
    %95 = vmatpush1.msra.mxu0 0.0
    %96 = vmatprep.subr.mxu0 0.0
    %97 = vmatpush1.msra.mxu0 0.0
    %98 = vmatprep.subr.mxu0 0.0
    %99 = vmatpush1.msra.mxu0 0.0
    %100 = vmatprep.subr.mxu0 0.0
    %101 = vmatpush1.msra.mxu0 0.0
    %102 = vmatprep.subr.mxu0 0.0
    %103 = vmatpush1.msra.mxu0 0.0
    %104 = vmatprep.subr.mxu0 0.0
    %105 = vmatpush1.msra.mxu0 0.0
    %106 = vmatprep.subr.mxu0 0.0
    %107 = vmatpush1.msra.mxu0 0.0
    %108 = vmatprep.subr.mxu0 0.0
    %109 = vmatpush1.msra.mxu0 0.0
    %110 = vmatprep.subr.mxu0 0.0
    %111 = vmatpush1.msra.mxu0 %v24
    %112 = vmatprep.subr.mxu0 0.0
    %113 = vmatpush1.msra.mxu0 %v23
    %114 = vmatprep.subr.mxu0 0.0
    %115 = vmatpush1.msra.mxu0 %v22
    %116 = vmatprep.subr.mxu0 0.0
    %117 = vmatpush1.msra.mxu0 %v21
    %118 = vmatprep.subr.mxu0 0.0
    %119 = vmatpush2.msra.mxu0 0.0
    %120 = vmatprep.subr.mxu0 0.0
    %121 = vmatpush2.msra.mxu0 0.0
    %122 = vmatprep.subr.mxu0 0.0
    %123 = vmatpush2.msra.mxu0 0.0
    %124 = vmatprep.subr.mxu0 0.0
    %125 = vmatpush2.msra.mxu0 0.0
    %126 = vmatprep.subr.mxu0 0.0
    %127 = vmatpush2.msra.mxu0 0.0
    %128 = vmatprep.subr.mxu0 0.0
    %129 = vmatpush2.msra.mxu0 0.0
    %130 = vmatprep.subr.mxu0 0.0
    %131 = vmatpush2.msra.mxu0 0.0
    %132 = vmatprep.subr.mxu0 0.0
    %133 = vmatpush2.msra.mxu0 0.0
    %134 = vmatprep.subr.mxu0 0.0
    %135 = vmatpush2.msra.mxu0 0.0
    %136 = vmatprep.subr.mxu0 0.0
    %137 = vmatpush2.msra.mxu0 0.0
    %138 = vmatprep.subr.mxu0 0.0
    %139 = vmatpush2.msra.mxu0 0.0
    %140 = vmatprep.subr.mxu0 0.0
    %141 = vmatpush2.msra.mxu0 0.0
    %142 = vmatprep.subr.mxu0 0.0
    %143 = vmatpush2.msra.mxu0 0.0
    %144 = vmatprep.subr.mxu0 0.0
    %145 = vmatpush2.msra.mxu0 0.0
    %146 = vmatprep.subr.mxu0 0.0
    %147 = vmatpush2.msra.mxu0 0.0
    %148 = vmatprep.subr.mxu0 0.0
    %149 = vmatpush2.msra.mxu0 0.0
    %150 = vmatprep.mubr.f32.mxu0 0.0
    %151 = vmatmul.mubr.f32.gmra.mxu0 %v69
    %v152 = vpop.f32.mrf.mxu0
    %v153 = vadd.f32 %v40, %v152
    %v154 = vpop.f32.mrf.mxu0
    %155 = vmatprep.mubr.f32.mxu0 0.0
    %156 = vmatmul.mubr.f32.gmra.mxu0 %v72
    %v157 = vpop.f32.mrf.mxu0
    %v158 = vadd.f32 %v45, %v157
    %v159 = vpop.f32.mrf.mxu0
    %160 = vmatprep.mubr.f32.mxu0 0.0
    %161 = vmatmul.mubr.f32.gmra.mxu0 %v75
    %v162 = vpop.f32.mrf.mxu0
    %v163 = vadd.f32 %v50, %v162
    %v164 = vpop.f32.mrf.mxu0
    %165 = vmatprep.mubr.f32.mxu0 0.0
    %166 = vmatmul.mubr.f32.gmra.mxu0 %v78
    %v167 = vpop.f32.mrf.mxu0
    %v168 = vadd.f32 %v55, %v167
    %v169 = vpop.f32.mrf.mxu0
    %170 = vmatprep.mubr.f32.mxu0 0.0
    %171 = vmatmul.mubr.f32.gmra.mxu0 %v81
    %v172 = vpop.f32.mrf.mxu0
    %v173 = vadd.f32 %v60, %v172
    %v174 = vpop.f32.mrf.mxu0
    %175 = vmatprep.mubr.f32.mxu0 0.0
    %176 = vmatmul.mubr.f32.gmra.mxu0 %v84
    %v177 = vpop.f32.mrf.mxu0
    %v178 = vadd.f32 %v65, %v177
    %v179 = vpop.f32.mrf.mxu0
    %180 = vdwg.mxu0
    %vm181 = vcmask 523264
    %v183 = vsel %vm181, %v173, 0
    %v186 = vsel %vm181, %v178, 0
    %v189 = vsel %vm181, %v163, 0
    %v192 = vsel %vm181, %v168, 0
    %194 = vmatprep.subr.mxu0 0.0
    %195 = vmatpush1.xpose.msra.mxu0 0.0
    %196 = vmatprep.subr.mxu0 0.0
    %197 = vmatpush1.xpose.msra.mxu0 0.0
    %198 = vmatprep.subr.mxu0 0.0
    %199 = vmatpush1.xpose.msra.mxu0 0.0
    %200 = vmatprep.subr.mxu0 0.0
    %201 = vmatpush1.xpose.msra.mxu0 0.0
    %202 = vmatprep.subr.mxu0 0.0
    %203 = vmatpush1.xpose.msra.mxu0 0.0
    %204 = vmatprep.subr.mxu0 0.0
    %205 = vmatpush1.xpose.msra.mxu0 0.0
    %206 = vmatprep.subr.mxu0 0.0
    %207 = vmatpush1.xpose.msra.mxu0 0.0
    %208 = vmatprep.subr.mxu0 0.0
    %209 = vmatpush1.xpose.msra.mxu0 0.0
    %210 = vmatprep.subr.mxu0 0.0
    %211 = vmatpush1.xpose.msra.mxu0 0.0
    %212 = vmatprep.subr.mxu0 0.0
    %213 = vmatpush1.xpose.msra.mxu0 0.0
    %214 = vmatprep.subr.mxu0 0.0
    %215 = vmatpush1.xpose.msra.mxu0 0.0
    %216 = vmatprep.subr.mxu0 0.0
    %217 = vmatpush1.xpose.msra.mxu0 0.0
    %218 = vmatprep.subr.mxu0 0.0
    %219 = vmatpush1.xpose.msra.mxu0 0.0
    %220 = vmatprep.subr.mxu0 0.0
    %221 = vmatpush1.xpose.msra.mxu0 0.0
    %222 = vmatprep.subr.mxu0 0.0
    %223 = vmatpush1.xpose.msra.mxu0 %v192
    %224 = vmatprep.subr.mxu0 0.0
    %225 = vmatpush1.xpose.msra.mxu0 %v189
    %226 = vmatprep.subr.mxu0 0.0
    %227 = vmatpush2.xpose.msra.mxu0 0.0
    %228 = vmatprep.subr.mxu0 0.0
    %229 = vmatpush2.xpose.msra.mxu0 0.0
    %230 = vmatprep.subr.mxu0 0.0
    %231 = vmatpush2.xpose.msra.mxu0 0.0
    %232 = vmatprep.subr.mxu0 0.0
    %233 = vmatpush2.xpose.msra.mxu0 0.0
    %234 = vmatprep.subr.mxu0 0.0
    %235 = vmatpush2.xpose.msra.mxu0 0.0
    %236 = vmatprep.subr.mxu0 0.0
    %237 = vmatpush2.xpose.msra.mxu0 0.0
    %238 = vmatprep.subr.mxu0 0.0
    %239 = vmatpush2.xpose.msra.mxu0 0.0
    %240 = vmatprep.subr.mxu0 0.0
    %241 = vmatpush2.xpose.msra.mxu0 0.0
    %242 = vmatprep.subr.mxu0 0.0
    %243 = vmatpush2.xpose.msra.mxu0 0.0
    %244 = vmatprep.subr.mxu0 0.0
    %245 = vmatpush2.xpose.msra.mxu0 0.0
    %246 = vmatprep.subr.mxu0 0.0
    %247 = vmatpush2.xpose.msra.mxu0 0.0
    %248 = vmatprep.subr.mxu0 0.0
    %249 = vmatpush2.xpose.msra.mxu0 0.0
    %250 = vmatprep.subr.mxu0 0.0
    %251 = vmatpush2.xpose.msra.mxu0 0.0
    %252 = vmatprep.subr.mxu0 0.0
    %253 = vmatpush2.xpose.msra.mxu0 0.0
    %254 = vmatprep.subr.mxu0 0.0
    %255 = vmatpush2.xpose.msra.mxu0 0.0
    %256 = vmatprep.subr.mxu0 0.0
    %257 = vmatpush2.xpose.msra.mxu0 0.0
    %258 = vmatprep.mubr.f32.mxu0 0.0
    %259 = vmatmul.mubr.f32.gmra.mxu0 %v183
    %v260 = vpop.f32.mrf.mxu0
    %v261 = vadd.f32 0.0, %v260
    %v262 = vpop.f32.mrf.mxu0
    %263 = vmatprep.mubr.f32.mxu0 0.0
    %264 = vmatmul.mubr.f32.gmra.mxu0 %v186
    %v265 = vpop.f32.mrf.mxu0
    %v266 = vadd.f32 0.0, %v265
    %v267 = vpop.f32.mrf.mxu0
    %268 = vdwg.mxu0
    %vm269 = vcmask 130048
    %v271 = vsel %vm269, %v261, 0
    %v274 = vsel %vm269, %v266, 0
    %276 = vmatprep.subr.mxu0 0.0
    %277 = vmatpush1.msra.mxu0 0.0
    %278 = vmatprep.subr.mxu0 0.0
    %279 = vmatpush1.msra.mxu0 0.0
    %280 = vmatprep.subr.mxu0 0.0
    %281 = vmatpush1.msra.mxu0 0.0
    %282 = vmatprep.subr.mxu0 0.0
    %283 = vmatpush1.msra.mxu0 0.0
    %284 = vmatprep.subr.mxu0 0.0
    %285 = vmatpush1.msra.mxu0 0.0
    %286 = vmatprep.subr.mxu0 0.0
    %287 = vmatpush1.msra.mxu0 0.0
    %288 = vmatprep.subr.mxu0 0.0
    %289 = vmatpush1.msra.mxu0 0.0
    %290 = vmatprep.subr.mxu0 0.0
    %291 = vmatpush1.msra.mxu0 0.0
    %292 = vmatprep.subr.mxu0 0.0
    %293 = vmatpush1.msra.mxu0 0.0
    %294 = vmatprep.subr.mxu0 0.0
    %295 = vmatpush1.msra.mxu0 0.0
    %296 = vmatprep.subr.mxu0 0.0
    %297 = vmatpush1.msra.mxu0 0.0
    %298 = vmatprep.subr.mxu0 0.0
    %299 = vmatpush1.msra.mxu0 0.0
    %300 = vmatprep.subr.mxu0 0.0
    %301 = vmatpush1.msra.mxu0 0.0
    %302 = vmatprep.subr.mxu0 0.0
    %303 = vmatpush1.msra.mxu0 0.0
    %304 = vmatprep.subr.mxu0 0.0
    %305 = vmatpush1.msra.mxu0 %v158
    %306 = vmatprep.subr.mxu0 0.0
    %307 = vmatpush1.msra.mxu0 %v153
    %308 = vmatprep.subr.mxu0 0.0
    %309 = vmatpush2.msra.mxu0 0.0
    %310 = vmatprep.subr.mxu0 0.0
    %311 = vmatpush2.msra.mxu0 0.0
    %312 = vmatprep.subr.mxu0 0.0
    %313 = vmatpush2.msra.mxu0 0.0
    %314 = vmatprep.subr.mxu0 0.0
    %315 = vmatpush2.msra.mxu0 0.0
    %316 = vmatprep.subr.mxu0 0.0
    %317 = vmatpush2.msra.mxu0 0.0
    %318 = vmatprep.subr.mxu0 0.0
    %319 = vmatpush2.msra.mxu0 0.0
    %320 = vmatprep.subr.mxu0 0.0
    %321 = vmatpush2.msra.mxu0 0.0
    %322 = vmatprep.subr.mxu0 0.0
    %323 = vmatpush2.msra.mxu0 0.0
    %324 = vmatprep.subr.mxu0 0.0
    %325 = vmatpush2.msra.mxu0 0.0
    %326 = vmatprep.subr.mxu0 0.0
    %327 = vmatpush2.msra.mxu0 0.0
    %328 = vmatprep.subr.mxu0 0.0
    %329 = vmatpush2.msra.mxu0 0.0
    %330 = vmatprep.subr.mxu0 0.0
    %331 = vmatpush2.msra.mxu0 0.0
    %332 = vmatprep.subr.mxu0 0.0
    %333 = vmatpush2.msra.mxu0 0.0
    %334 = vmatprep.subr.mxu0 0.0
    %335 = vmatpush2.msra.mxu0 0.0
    %336 = vmatprep.subr.mxu0 0.0
    %337 = vmatpush2.msra.mxu0 0.0
    %338 = vmatprep.subr.mxu0 0.0
    %339 = vmatpush2.msra.mxu0 0.0
    %340 = vmatprep.mubr.f32.mxu0 0.0
    %341 = vmatmul.mubr.f32.gmra.mxu0 %v271
    %v342 = vpop.f32.mrf.mxu0
    %v343 = vadd.f32 0.0, %v342
    %v344 = vpop.f32.mrf.mxu0
    %345 = vmatprep.mubr.f32.mxu0 0.0
    %346 = vmatmul.mubr.f32.gmra.mxu0 %v274
    %v347 = vpop.f32.mrf.mxu0
    %v348 = vadd.f32 0.0, %v347
    %v349 = vpop.f32.mrf.mxu0
    %350 = vdwg.mxu0
    %351 = vrot.lane.b32.xlu0 %v173, 64
    %v352 = vpop.permute.xlu0 %351
    %353 = vrot.lane.b32.xlu0 %v178, 64
    %v354 = vpop.permute.xlu0 %353
    %355 = vrot.lane.b32.xlu0 %v163, 64
    %v356 = vpop.permute.xlu0 %355
    %357 = vrot.lane.b32.xlu0 %v168, 64
    %v358 = vpop.permute.xlu0 %357
    %v359 = vsel %vm181, %v352, 0
    %v361 = vsel %vm181, %v354, 0
    %v363 = vsel %vm181, %v356, 0
    %v365 = vsel %vm181, %v358, 0
    %367 = vmatprep.subr.mxu0 0.0
    %368 = vmatpush1.xpose.msra.mxu0 0.0
    %369 = vmatprep.subr.mxu0 0.0
    %370 = vmatpush1.xpose.msra.mxu0 0.0
    %371 = vmatprep.subr.mxu0 0.0
    %372 = vmatpush1.xpose.msra.mxu0 0.0
    %373 = vmatprep.subr.mxu0 0.0
    %374 = vmatpush1.xpose.msra.mxu0 0.0
    %375 = vmatprep.subr.mxu0 0.0
    %376 = vmatpush1.xpose.msra.mxu0 0.0
    %377 = vmatprep.subr.mxu0 0.0
    %378 = vmatpush1.xpose.msra.mxu0 0.0
    %379 = vmatprep.subr.mxu0 0.0
    %380 = vmatpush1.xpose.msra.mxu0 0.0
    %381 = vmatprep.subr.mxu0 0.0
    %382 = vmatpush1.xpose.msra.mxu0 0.0
    %383 = vmatprep.subr.mxu0 0.0
    %384 = vmatpush1.xpose.msra.mxu0 0.0
    %385 = vmatprep.subr.mxu0 0.0
    %386 = vmatpush1.xpose.msra.mxu0 0.0
    %387 = vmatprep.subr.mxu0 0.0
    %388 = vmatpush1.xpose.msra.mxu0 0.0
    %389 = vmatprep.subr.mxu0 0.0
    %390 = vmatpush1.xpose.msra.mxu0 0.0
    %391 = vmatprep.subr.mxu0 0.0
    %392 = vmatpush1.xpose.msra.mxu0 0.0
    %393 = vmatprep.subr.mxu0 0.0
    %394 = vmatpush1.xpose.msra.mxu0 0.0
    %395 = vmatprep.subr.mxu0 0.0
    %396 = vmatpush1.xpose.msra.mxu0 %v365
    %397 = vmatprep.subr.mxu0 0.0
    %398 = vmatpush1.xpose.msra.mxu0 %v363
    %399 = vmatprep.subr.mxu0 0.0
    %400 = vmatpush2.xpose.msra.mxu0 0.0
    %401 = vmatprep.subr.mxu0 0.0
    %402 = vmatpush2.xpose.msra.mxu0 0.0
    %403 = vmatprep.subr.mxu0 0.0
    %404 = vmatpush2.xpose.msra.mxu0 0.0
    %405 = vmatprep.subr.mxu0 0.0
    %406 = vmatpush2.xpose.msra.mxu0 0.0
    %407 = vmatprep.subr.mxu0 0.0
    %408 = vmatpush2.xpose.msra.mxu0 0.0
    %409 = vmatprep.subr.mxu0 0.0
    %410 = vmatpush2.xpose.msra.mxu0 0.0
    %411 = vmatprep.subr.mxu0 0.0
    %412 = vmatpush2.xpose.msra.mxu0 0.0
    %413 = vmatprep.subr.mxu0 0.0
    %414 = vmatpush2.xpose.msra.mxu0 0.0
    %415 = vmatprep.subr.mxu0 0.0
    %416 = vmatpush2.xpose.msra.mxu0 0.0
    %417 = vmatprep.subr.mxu0 0.0
    %418 = vmatpush2.xpose.msra.mxu0 0.0
    %419 = vmatprep.subr.mxu0 0.0
    %420 = vmatpush2.xpose.msra.mxu0 0.0
    %421 = vmatprep.subr.mxu0 0.0
    %422 = vmatpush2.xpose.msra.mxu0 0.0
    %423 = vmatprep.subr.mxu0 0.0
    %424 = vmatpush2.xpose.msra.mxu0 0.0
    %425 = vmatprep.subr.mxu0 0.0
    %426 = vmatpush2.xpose.msra.mxu0 0.0
    %427 = vmatprep.subr.mxu0 0.0
    %428 = vmatpush2.xpose.msra.mxu0 0.0
    %429 = vmatprep.subr.mxu0 0.0
    %430 = vmatpush2.xpose.msra.mxu0 0.0
    %431 = vmatprep.mubr.f32.mxu0 0.0
    %432 = vmatmul.mubr.f32.gmra.mxu0 %v359
    %v433 = vpop.f32.mrf.mxu0
    %v434 = vadd.f32 0.0, %v433
    %v435 = vpop.f32.mrf.mxu0
    %436 = vmatprep.mubr.f32.mxu0 0.0
    %437 = vmatmul.mubr.f32.gmra.mxu0 %v361
    %v438 = vpop.f32.mrf.mxu0
    %v439 = vadd.f32 0.0, %v438
    %v440 = vpop.f32.mrf.mxu0
    %441 = vdwg.mxu0
    %444 = vrot.lane.b32.xlu0 %v153, 64
    %v445 = vpop.permute.xlu0 %444
    %446 = vrot.lane.b32.xlu0 %v158, 64
    %v447 = vpop.permute.xlu0 %446
    %v451 = vsel %vm269, %v434, 0
    %v454 = vsel %vm269, %v439, 0
    %456 = vmatprep.subr.mxu0 0.0
    %457 = vmatpush1.msra.mxu0 0.0
    %458 = vmatprep.subr.mxu0 0.0
    %459 = vmatpush1.msra.mxu0 0.0
    %460 = vmatprep.subr.mxu0 0.0
    %461 = vmatpush1.msra.mxu0 0.0
    %462 = vmatprep.subr.mxu0 0.0
    %463 = vmatpush1.msra.mxu0 0.0
    %464 = vmatprep.subr.mxu0 0.0
    %465 = vmatpush1.msra.mxu0 0.0
    %466 = vmatprep.subr.mxu0 0.0
    %467 = vmatpush1.msra.mxu0 0.0
    %468 = vmatprep.subr.mxu0 0.0
    %469 = vmatpush1.msra.mxu0 0.0
    %470 = vmatprep.subr.mxu0 0.0
    %471 = vmatpush1.msra.mxu0 0.0
    %472 = vmatprep.subr.mxu0 0.0
    %473 = vmatpush1.msra.mxu0 0.0
    %474 = vmatprep.subr.mxu0 0.0
    %475 = vmatpush1.msra.mxu0 0.0
    %476 = vmatprep.subr.mxu0 0.0
    %477 = vmatpush1.msra.mxu0 0.0
    %478 = vmatprep.subr.mxu0 0.0
    %479 = vmatpush1.msra.mxu0 0.0
    %480 = vmatprep.subr.mxu0 0.0
    %481 = vmatpush1.msra.mxu0 0.0
    %482 = vmatprep.subr.mxu0 0.0
    %483 = vmatpush1.msra.mxu0 0.0
    %484 = vmatprep.subr.mxu0 0.0
    %485 = vmatpush1.msra.mxu0 %v447
    %486 = vmatprep.subr.mxu0 0.0
    %487 = vmatpush1.msra.mxu0 %v445
    %488 = vmatprep.subr.mxu0 0.0
    %489 = vmatpush2.msra.mxu0 0.0
    %490 = vmatprep.subr.mxu0 0.0
    %491 = vmatpush2.msra.mxu0 0.0
    %492 = vmatprep.subr.mxu0 0.0
    %493 = vmatpush2.msra.mxu0 0.0
    %494 = vmatprep.subr.mxu0 0.0
    %495 = vmatpush2.msra.mxu0 0.0
    %496 = vmatprep.subr.mxu0 0.0
    %497 = vmatpush2.msra.mxu0 0.0
    %498 = vmatprep.subr.mxu0 0.0
    %499 = vmatpush2.msra.mxu0 0.0
    %500 = vmatprep.subr.mxu0 0.0
    %501 = vmatpush2.msra.mxu0 0.0
    %502 = vmatprep.subr.mxu0 0.0
    %503 = vmatpush2.msra.mxu0 0.0
    %504 = vmatprep.subr.mxu0 0.0
    %505 = vmatpush2.msra.mxu0 0.0
    %506 = vmatprep.subr.mxu0 0.0
    %507 = vmatpush2.msra.mxu0 0.0
    %508 = vmatprep.subr.mxu0 0.0
    %509 = vmatpush2.msra.mxu0 0.0
    %510 = vmatprep.subr.mxu0 0.0
    %511 = vmatpush2.msra.mxu0 0.0
    %512 = vmatprep.subr.mxu0 0.0
    %513 = vmatpush2.msra.mxu0 0.0
    %514 = vmatprep.subr.mxu0 0.0
    %515 = vmatpush2.msra.mxu0 0.0
    %516 = vmatprep.subr.mxu0 0.0
    %517 = vmatpush2.msra.mxu0 0.0
    %518 = vmatprep.subr.mxu0 0.0
    %519 = vmatpush2.msra.mxu0 0.0
    %520 = vmatprep.mubr.f32.mxu0 0.0
    %521 = vmatmul.mubr.f32.gmra.mxu0 %v451
    %v522 = vpop.f32.mrf.mxu0
    %v523 = vadd.f32 0.0, %v522
    %v524 = vpop.f32.mrf.mxu0
    %525 = vmatprep.mubr.f32.mxu0 0.0
    %526 = vmatmul.mubr.f32.gmra.mxu0 %v454
    %v527 = vpop.f32.mrf.mxu0
    %v528 = vadd.f32 0.0, %v527
    %v529 = vpop.f32.mrf.mxu0
    %530 = vdwg.mxu0
    %533 = vrot.lane.b32.xlu0 %v523, 64
    %v534 = vpop.permute.xlu0 %533
    %535 = vrot.lane.b32.xlu0 %v528, 64
    %v536 = vpop.permute.xlu0 %535
    %v539 = vsel %vm181, %v343, %v534
    %v540 = vsel %vm181, %v348, %v536
    %v541 = vld [vmem:[%s3] sm:$0xff]
    %v542 = vld [vmem:[%s3 + $0x8] sm:$0xff]
    %v543 = vld [vmem:[%s3 + $0x10] sm:$0xff]
    %v544 = vld [vmem:[%s3 + $0x18] sm:$0xff]
    %v545 = vld [vmem:[%s4] sm:$0xff]
    %v546 = vld [vmem:[%s4 + $0x8] sm:$0xff]
    %v547 = vld [vmem:[%s4 + $0x10] sm:$0xff]
    %v548 = vld [vmem:[%s4 + $0x18] sm:$0xff]
    %550 = vset.pattern.permute.xlu0 0
    %551 = vperm.xlu0 %550, %v545
    %v552 = vpop.permute.xlu0 %551
    %555 = vset.pattern.permute.xlu0 0
    %556 = vperm.xlu0 %555, %v546
    %v557 = vpop.permute.xlu0 %556
    %560 = vset.pattern.permute.xlu0 0
    %561 = vperm.xlu0 %560, %v547
    %v562 = vpop.permute.xlu0 %561
    %565 = vset.pattern.permute.xlu0 0
    %566 = vperm.xlu0 %565, %v548
    %v567 = vpop.permute.xlu0 %566
    %v570 = vsel %vm269, %v541, 0
    %v573 = vsel %vm269, %v542, 0
    %v576 = vsel %vm269, %v543, 0
    %v579 = vsel %vm269, %v544, 0
    %581 = vmatprep.subr.mxu0 0.0
    %582 = vmatpush1.msra.mxu0 0.0
    %583 = vmatprep.subr.mxu0 0.0
    %584 = vmatpush1.msra.mxu0 0.0
    %585 = vmatprep.subr.mxu0 0.0
    %586 = vmatpush1.msra.mxu0 0.0
    %587 = vmatprep.subr.mxu0 0.0
    %588 = vmatpush1.msra.mxu0 0.0
    %589 = vmatprep.subr.mxu0 0.0
    %590 = vmatpush1.msra.mxu0 0.0
    %591 = vmatprep.subr.mxu0 0.0
    %592 = vmatpush1.msra.mxu0 0.0
    %593 = vmatprep.subr.mxu0 0.0
    %594 = vmatpush1.msra.mxu0 0.0
    %595 = vmatprep.subr.mxu0 0.0
    %596 = vmatpush1.msra.mxu0 0.0
    %597 = vmatprep.subr.mxu0 0.0
    %598 = vmatpush1.msra.mxu0 0.0
    %599 = vmatprep.subr.mxu0 0.0
    %600 = vmatpush1.msra.mxu0 0.0
    %601 = vmatprep.subr.mxu0 0.0
    %602 = vmatpush1.msra.mxu0 0.0
    %603 = vmatprep.subr.mxu0 0.0
    %604 = vmatpush1.msra.mxu0 0.0
    %605 = vmatprep.subr.mxu0 0.0
    %606 = vmatpush1.msra.mxu0 0.0
    %607 = vmatprep.subr.mxu0 0.0
    %608 = vmatpush1.msra.mxu0 0.0
    %609 = vmatprep.subr.mxu0 0.0
    %610 = vmatpush1.msra.mxu0 %v540
    %611 = vmatprep.subr.mxu0 0.0
    %612 = vmatpush1.msra.mxu0 %v539
    %613 = vmatprep.subr.mxu0 0.0
    %614 = vmatpush2.msra.mxu0 0.0
    %615 = vmatprep.subr.mxu0 0.0
    %616 = vmatpush2.msra.mxu0 0.0
    %617 = vmatprep.subr.mxu0 0.0
    %618 = vmatpush2.msra.mxu0 0.0
    %619 = vmatprep.subr.mxu0 0.0
    %620 = vmatpush2.msra.mxu0 0.0
    %621 = vmatprep.subr.mxu0 0.0
    %622 = vmatpush2.msra.mxu0 0.0
    %623 = vmatprep.subr.mxu0 0.0
    %624 = vmatpush2.msra.mxu0 0.0
    %625 = vmatprep.subr.mxu0 0.0
    %626 = vmatpush2.msra.mxu0 0.0
    %627 = vmatprep.subr.mxu0 0.0
    %628 = vmatpush2.msra.mxu0 0.0
    %629 = vmatprep.subr.mxu0 0.0
    %630 = vmatpush2.msra.mxu0 0.0
    %631 = vmatprep.subr.mxu0 0.0
    %632 = vmatpush2.msra.mxu0 0.0
    %633 = vmatprep.subr.mxu0 0.0
    %634 = vmatpush2.msra.mxu0 0.0
    %635 = vmatprep.subr.mxu0 0.0
    %636 = vmatpush2.msra.mxu0 0.0
    %637 = vmatprep.subr.mxu0 0.0
    %638 = vmatpush2.msra.mxu0 0.0
    %639 = vmatprep.subr.mxu0 0.0
    %640 = vmatpush2.msra.mxu0 0.0
    %641 = vmatprep.subr.mxu0 0.0
    %642 = vmatpush2.msra.mxu0 0.0
    %643 = vmatprep.subr.mxu0 0.0
    %644 = vmatpush2.msra.mxu0 0.0
    %645 = vmatprep.mubr.f32.mxu0 0.0
    %646 = vmatmul.mubr.f32.gmra.mxu0 %v570
    %v647 = vpop.f32.mrf.mxu0
    %v648 = vadd.f32 %v552, %v647
    %v649 = vpop.f32.mrf.mxu0
    %650 = vmatprep.mubr.f32.mxu0 0.0
    %651 = vmatmul.mubr.f32.gmra.mxu0 %v573
    %v652 = vpop.f32.mrf.mxu0
    %v653 = vadd.f32 %v557, %v652
    %v654 = vpop.f32.mrf.mxu0
    %655 = vmatprep.mubr.f32.mxu0 0.0
    %656 = vmatmul.mubr.f32.gmra.mxu0 %v576
    %v657 = vpop.f32.mrf.mxu0
    %v658 = vadd.f32 %v562, %v657
    %v659 = vpop.f32.mrf.mxu0
    %660 = vmatprep.mubr.f32.mxu0 0.0
    %661 = vmatmul.mubr.f32.gmra.mxu0 %v579
    %v662 = vpop.f32.mrf.mxu0
    %v663 = vadd.f32 %v567, %v662
    %v664 = vpop.f32.mrf.mxu0
    %665 = vdwg.mxu0
    %v666 = vadd.f32 %v648, %v21
    %v667 = vadd.f32 %v653, %v22
    %v668 = vadd.f32 %v658, %v23
    %v669 = vadd.f32 %v663, %v24
    %670 = vst [vmem:[#allocation2] sm:$0xff] %v666
    %671 = vst [vmem:[#allocation2 + $0x8] sm:$0xff] %v667
    %672 = vst [vmem:[#allocation2 + $0x10] sm:$0xff] %v668
    %673 = vst [vmem:[#allocation2 + $0x18] sm:$0xff] %v669
    // Predicated region
    $region22: #{tpu_custom_call.1} parent=1 // pred_check
      _
    $region23: #{tpu_custom_call.1} parent=1 // pred_check_branch
      %675 = sbr.rel (0) target = $region25
    $region24: #{tpu_custom_call.1} parent=1 // pred_region
      %s677 = ssub.s32 512, 512
      %678 = vsyncadd [#allocation3], %s677
      %s679 = sshll.u32 [#allocation2], 4
      %s680 = int_to_ptr.vmem [resolvable:$true] %s679
      %685 = dma.vmem_to_hbm [thread:$0]  %s680, 512, %s5, [#allocation3], 128, 128, 8
    $region25: #{tpu_custom_call.1} parent=1 // pred_fallthru
      _
    // Predicated region
    $region26: #{tpu_custom_call.1} parent=1 // pred_check
      _
    $region27: #{tpu_custom_call.1} parent=1 // pred_check_branch
      %687 = sbr.rel (0) target = $region29
    $region28: #{tpu_custom_call.1} parent=1 // pred_region
      %688 = dma.done [#allocation3], 512
    $region29: #{tpu_custom_call.1} parent=1 // pred_fallthru
      _
    %689 = vsyncpa [#allocation3], 1

</llo_original>
